<compile_context>
chip_gen: v6e
topology: v6e:2x2x1
jax: 0.10.0
libtpu: 0.0.40
codegen_flags: <defaults>
</compile_context>

<pallas_src>
import functools

import jax
import jax.numpy as jnp
from jax import lax
from jax.experimental import pallas as pl
from jax.experimental.pallas import tpu as pltpu


def _attention_block_kernel(x_ref, wq_ref, wk_ref, wv_ref,
                            bq_ref, bk_ref, bv_ref, wo_ref, bo_ref,
                            o_ref, *, n_heads: int, d_k: int):
    """Per-batch-element attention block, transposed ([C, S]) layout.

    x_ref : (1, C, S)   input (NCHW flattened) for this batch element
    wq/wk/wv: (D, C)    head-major projection weights (scale folded into wq)
    bq/bk/bv: (D, 1)    projection biases (scale folded into bq)
    wo_ref: (C, D)      output projection weight (torch [out, in] layout)
    bo_ref: (C, 1)      output projection bias
    o_ref : (1, C, S)   output (NCHW flattened)
    """
    X = x_ref[0]                                                  # [C, S] f32
    S = X.shape[-1]
    D = n_heads * d_k

    # q/k/v projections; 1/sqrt(d_k) pre-folded into wq/bq by the wrapper.
    qT = jnp.dot(wq_ref[...], X, preferred_element_type=jnp.float32) + bq_ref[...]
    kT = jnp.dot(wk_ref[...], X, preferred_element_type=jnp.float32) + bk_ref[...]
    vT = jnp.dot(wv_ref[...], X, preferred_element_type=jnp.float32) + bv_ref[...]

    # Head-batched views [n_heads, d_k, S] (leading-dim split only; rows are
    # already head-major thanks to the wrapper's weight permutation).
    qh = qT.reshape(n_heads, d_k, S)
    kh = kT.reshape(n_heads, d_k, S)
    vh = vT.reshape(n_heads, d_k, S)

    # scores[h, i, j] = <q_i, k_j>   (scale already folded into q).
    # NOTE: at production d_k, also cast qh/kh to bf16 here (the "optional"
    # MXU cast from the review); kept f32 at d_k=4 where this matmul is
    # output-bound and the f32 scores feed exp().
    s = lax.dot_general(qh, kh, (((1,), (1,)), ((0,), (0,))),
                        preferred_element_type=jnp.float32)      # [h, Si, Sj]

    # torch softmax(dim=1): normalize over the QUERY axis i (axis 1 here).
    m = jnp.max(s, axis=1, keepdims=True)                        # [h, 1, Sj]
    e = jnp.exp(s - m)                                           # f32 EUP (v5e-safe)
    l = jnp.sum(e, axis=1, keepdims=True)                        # [h, 1, Sj]
    inv_l = pl.reciprocal(l, approx=True)                        # EUP slot, ~free

    # Fold the per-key-column denominator into v, cast both probability-matmul
    # operands to bf16 (flash-attention style), accumulate in f32 on the MXU.
    p = e.astype(jnp.bfloat16)                                   # [h, Si, Sj]
    v_scaled = (vh * inv_l).astype(jnp.bfloat16)                 # [h, d_k, Sj]

    # resT[h, d, i] = sum_j v_scaled[h, d, j] * p[h, i, j]
    resT = lax.dot_general(v_scaled, p, (((2,), (2,)), ((0,), (0,))),
                           preferred_element_type=jnp.float32)   # [h, d_k, Si]

    # ONE fused output projection over all heads (contraction K = D), then
    # bias + residual.
    resT_all = resT.reshape(D, S)                                # [D, S]
    outT = jnp.dot(wo_ref[...], resT_all,
                   preferred_element_type=jnp.float32) + bo_ref[...] + X
    o_ref[0] = outT.astype(o_ref.dtype)


def attention_block_pallas(x_nchw, wp, bp, wo, bo, *, n_heads: int, d_k: int):
    """x_nchw: [B, C, H, W] float32.  Weights in torch Linear layout [out, in].

    Returns [B, C, H, W].
    """
    B, C, H, W = x_nchw.shape
    S = H * W
    D = n_heads * d_k
    scale = float(d_k) ** -0.5

    # NCHW flattened IS the [B, C, S] layout the kernel wants: no transpose.
    x_cs = x_nchw.reshape(B, C, S)

    # One-time host-side parameter prep (free at run time):
    #  * split torch's per-head-interleaved projection rows [.. q|k|v ..] into
    #    three head-major [D, C] matrices so the kernel never slices q/k/v
    #    across (8,128) vreg-tile boundaries;
    #  * fold the 1/sqrt(d_k) attention scale into the q weights/bias.
    wp4 = wp.reshape(n_heads, 3, d_k, C)         # [head, {q,k,v}, d, C]
    bp3 = bp.reshape(n_heads, 3, d_k)
    wq = (wp4[:, 0] * scale).reshape(D, C)
    wk = wp4[:, 1].reshape(D, C)
    wv = wp4[:, 2].reshape(D, C)
    bq = (bp3[:, 0] * scale).reshape(D, 1)
    bk = bp3[:, 1].reshape(D, 1)
    bv = bp3[:, 2].reshape(D, 1)
    bo2 = bo.reshape(C, 1)

    # Heuristic scoped-VMEM budget: the per-head [S,S] f32 scores/exp + bf16
    # probs dominate at large S.  Raise the limit past the 32 MiB default when
    # needed (v6e: up to 128 MiB physical).  See TODO(synk) in the header for
    # the key-axis-tiled path that v7x (64 MiB physical) needs beyond that.
    sxs_bytes = n_heads * S * S * (4 + 4 + 2)
    io_bytes = 4 * C * S * 4 + (3 * D * C + C * D + 4 * D + C) * 4
    vmem_limit = None
    if sxs_bytes + io_bytes > (28 << 20):
        vmem_limit = min(sxs_bytes + io_bytes + (16 << 20), 120 << 20)

    kernel = functools.partial(_attention_block_kernel,
                               n_heads=n_heads, d_k=d_k)

    out_cs = pl.pallas_call(
        kernel,
        out_shape=jax.ShapeDtypeStruct((B, C, S), x_cs.dtype),
        grid_spec=pltpu.PrefetchScalarGridSpec(
            num_scalar_prefetch=0,
            grid=(B,),          # one batch element / step; "parallel" -> v7x 2 TCs
            in_specs=[
                pl.BlockSpec((1, C, S), lambda b: (b, 0, 0)),   # x (lane-dense)
                pl.BlockSpec((D, C), lambda b: (0, 0)),         # wq (scale folded)
                pl.BlockSpec((D, C), lambda b: (0, 0)),         # wk
                pl.BlockSpec((D, C), lambda b: (0, 0)),         # wv
                pl.BlockSpec((D, 1), lambda b: (0, 0)),         # bq (scale folded)
                pl.BlockSpec((D, 1), lambda b: (0, 0)),         # bk
                pl.BlockSpec((D, 1), lambda b: (0, 0)),         # bv
                pl.BlockSpec((C, D), lambda b: (0, 0)),         # wo
                pl.BlockSpec((C, 1), lambda b: (0, 0)),         # bo
            ],
            out_specs=pl.BlockSpec((1, C, S), lambda b: (b, 0, 0)),  # lane-dense
        ),
        compiler_params=pltpu.CompilerParams(
            dimension_semantics=("parallel",),
            vmem_limit_bytes=vmem_limit),
    )(x_cs, wq, wk, wv, bq, bk, bv, wo, bo2)

    # Free reshape back to NCHW (no data movement).
    return out_cs.reshape(B, C, H, W)


def attention_block_ref(x_nchw, wp, bp, wo, bo, *, n_heads: int, d_k: int):
    """Pure-JAX reference matching the PyTorch forward exactly (f32 highest)."""
    B, C, H, W = x_nchw.shape
    S = H * W
    scale = float(d_k) ** -0.5
    x = x_nchw.reshape(B, C, S).transpose(0, 2, 1)                       # [B, S, C]
    qkv = jnp.einsum('bsc,oc->bso', x, wp, precision='highest') + bp     # [B, S, 3*H*dk]
    qkv = qkv.reshape(B, S, n_heads, 3 * d_k)
    q, k, v = jnp.split(qkv, 3, axis=-1)
    attn = jnp.einsum('bihd,bjhd->bijh', q, k, precision='highest') * scale
    attn = jax.nn.softmax(attn, axis=1)                                  # torch softmax(dim=1)
    res = jnp.einsum('bijh,bjhd->bihd', attn, v, precision='highest')
    res = res.reshape(B, S, n_heads * d_k)
    out = jnp.einsum('bsd,cd->bsc', res, wo, precision='highest') + bo + x
    return out.transpose(0, 2, 1).reshape(B, C, H, W)


if __name__ == "__main__":
    # Small shapes consistent with the module's forward: x is [B, C, H, W].
    B, C, H, W = 2, 4, 16, 16
    n_heads = 1
    d_k = C          # module default: d_k = n_channels
    D = n_heads * d_k

    key = jax.random.PRNGKey(0)
    kx, kwp, kbp, kwo, kbo = jax.random.split(key, 5)

    x = jax.random.normal(kx, (B, C, H, W), dtype=jnp.float32)

    # Deterministic synthetic parameters in torch Linear layout: [out, in].
    wp = jax.random.normal(kwp, (3 * D, C), dtype=jnp.float32) * (1.0 / jnp.sqrt(C))
    bp = jax.random.normal(kbp, (3 * D,), dtype=jnp.float32) * 0.01
    wo = jax.random.normal(kwo, (C, D), dtype=jnp.float32) * (1.0 / jnp.sqrt(D))
    bo = jax.random.normal(kbo, (C,), dtype=jnp.float32) * 0.01

    out = attention_block_pallas(x, wp, bp, wo, bo, n_heads=n_heads, d_k=d_k)
    out = jax.block_until_ready(out)

    ref = attention_block_ref(x, wp, bp, wo, bo, n_heads=n_heads, d_k=d_k)
    assert out.shape == (B, C, H, W)
    # Tolerance sized for the bf16 attention-probability matmul operands
    # (per performance review); observed error is well below this.
    assert jnp.allclose(out, ref, rtol=1e-2, atol=1e-2), "mismatch vs reference"

    print("KERNEL_OK")
</pallas_src>

<mosaic_0001>
module attributes {stable_mosaic.version = 11 : i64} {
  func.func @_attention_block_kernel(%arg0: i32, %arg1: memref<1x4x256xf32, #tpu.memory_space<vmem>>, %arg2: memref<4x4xf32, #tpu.memory_space<vmem>>, %arg3: memref<4x4xf32, #tpu.memory_space<vmem>>, %arg4: memref<4x4xf32, #tpu.memory_space<vmem>>, %arg5: memref<4x1xf32, #tpu.memory_space<vmem>>, %arg6: memref<4x1xf32, #tpu.memory_space<vmem>>, %arg7: memref<4x1xf32, #tpu.memory_space<vmem>>, %arg8: memref<4x4xf32, #tpu.memory_space<vmem>>, %arg9: memref<4x1xf32, #tpu.memory_space<vmem>>, %arg10: memref<1x4x256xf32, #tpu.memory_space<vmem>>) attributes {dimension_semantics = [#tpu.dimension_semantics<parallel>], iteration_bounds = array<i64: 2>, scalar_prefetch = 0 : i64, scratch_operands = 0 : i64, tpu.core_type = #tpu.core_type<tc>, window_params = [{transform_indices = @transform_0, window_bounds = array<i64: 1, 4, 256>}, {pipeline_mode = #tpu.pipeline_mode<synchronous>, transform_indices = @transform_1, window_bounds = array<i64: 4, 4>}, {pipeline_mode = #tpu.pipeline_mode<synchronous>, transform_indices = @transform_2, window_bounds = array<i64: 4, 4>}, {pipeline_mode = #tpu.pipeline_mode<synchronous>, transform_indices = @transform_3, window_bounds = array<i64: 4, 4>}, {pipeline_mode = #tpu.pipeline_mode<synchronous>, transform_indices = @transform_4, window_bounds = array<i64: 4, 1>}, {pipeline_mode = #tpu.pipeline_mode<synchronous>, transform_indices = @transform_5, window_bounds = array<i64: 4, 1>}, {pipeline_mode = #tpu.pipeline_mode<synchronous>, transform_indices = @transform_6, window_bounds = array<i64: 4, 1>}, {pipeline_mode = #tpu.pipeline_mode<synchronous>, transform_indices = @transform_7, window_bounds = array<i64: 4, 4>}, {pipeline_mode = #tpu.pipeline_mode<synchronous>, transform_indices = @transform_8, window_bounds = array<i64: 4, 1>}, {transform_indices = @transform_9, window_bounds = array<i64: 1, 4, 256>}]} {
    %c0 = arith.constant 0 : index
    %c0_0 = arith.constant 0 : index
    %c0_1 = arith.constant 0 : index
    %0 = vector.load %arg1[%c0, %c0_0, %c0_1] : memref<1x4x256xf32, #tpu.memory_space<vmem>>, vector<1x4x256xf32>
    %1 = vector.shape_cast %0 : vector<1x4x256xf32> to vector<4x256xf32>
    %c0_2 = arith.constant 0 : index
    %c0_3 = arith.constant 0 : index
    %2 = vector.load %arg2[%c0_2, %c0_3] : memref<4x4xf32, #tpu.memory_space<vmem>>, vector<4x4xf32>
    %cst = arith.constant dense<0.000000e+00> : vector<4x256xf32>
    %3 = tpu.matmul %2, %1, %cst {dimension_numbers = #tpu.dot_dimension_numbers<[1], [0], [0], [1], [0, 0, 1, 1], [], []>} : vector<4x4xf32>, vector<4x256xf32>, vector<4x256xf32> -> vector<4x256xf32>
    %c0_4 = arith.constant 0 : index
    %c0_5 = arith.constant 0 : index
    %4 = vector.load %arg5[%c0_4, %c0_5] : memref<4x1xf32, #tpu.memory_space<vmem>>, vector<4x1xf32>
    %5 = vector.broadcast %4 : vector<4x1xf32> to vector<4x256xf32>
    %6 = arith.addf %3, %5 : vector<4x256xf32>
    %c0_6 = arith.constant 0 : index
    %c0_7 = arith.constant 0 : index
    %7 = vector.load %arg3[%c0_6, %c0_7] : memref<4x4xf32, #tpu.memory_space<vmem>>, vector<4x4xf32>
    %cst_8 = arith.constant dense<0.000000e+00> : vector<4x256xf32>
    %8 = tpu.matmul %7, %1, %cst_8 {dimension_numbers = #tpu.dot_dimension_numbers<[1], [0], [0], [1], [0, 0, 1, 1], [], []>} : vector<4x4xf32>, vector<4x256xf32>, vector<4x256xf32> -> vector<4x256xf32>
    %c0_9 = arith.constant 0 : index
    %c0_10 = arith.constant 0 : index
    %9 = vector.load %arg6[%c0_9, %c0_10] : memref<4x1xf32, #tpu.memory_space<vmem>>, vector<4x1xf32>
    %10 = vector.broadcast %9 : vector<4x1xf32> to vector<4x256xf32>
    %11 = arith.addf %8, %10 : vector<4x256xf32>
    %c0_11 = arith.constant 0 : index
    %c0_12 = arith.constant 0 : index
    %12 = vector.load %arg4[%c0_11, %c0_12] : memref<4x4xf32, #tpu.memory_space<vmem>>, vector<4x4xf32>
    %cst_13 = arith.constant dense<0.000000e+00> : vector<4x256xf32>
    %13 = tpu.matmul %12, %1, %cst_13 {dimension_numbers = #tpu.dot_dimension_numbers<[1], [0], [0], [1], [0, 0, 1, 1], [], []>} : vector<4x4xf32>, vector<4x256xf32>, vector<4x256xf32> -> vector<4x256xf32>
    %c0_14 = arith.constant 0 : index
    %c0_15 = arith.constant 0 : index
    %14 = vector.load %arg7[%c0_14, %c0_15] : memref<4x1xf32, #tpu.memory_space<vmem>>, vector<4x1xf32>
    %15 = vector.broadcast %14 : vector<4x1xf32> to vector<4x256xf32>
    %16 = arith.addf %13, %15 : vector<4x256xf32>
    %17 = vector.shape_cast %6 : vector<4x256xf32> to vector<1x4x256xf32>
    %18 = vector.shape_cast %11 : vector<4x256xf32> to vector<1x4x256xf32>
    %19 = vector.shape_cast %16 : vector<4x256xf32> to vector<1x4x256xf32>
    %cst_16 = arith.constant dense<0.000000e+00> : vector<1x256x256xf32>
    %20 = tpu.matmul %17, %18, %cst_16 {dimension_numbers = #tpu.dot_dimension_numbers<[1], [1], [2], [2], [0, 0, 0, 2, 1, 2], [0], [0]>} : vector<1x4x256xf32>, vector<1x4x256xf32>, vector<1x256x256xf32> -> vector<1x256x256xf32>
    %cst_17 = arith.constant dense<0xFF800000> : vector<1x256xf32>
    %21 = vector.multi_reduction <maximumf>, %20, %cst_17 [1] : vector<1x256x256xf32> to vector<1x256xf32>
    %22 = vector.shape_cast %21 : vector<1x256xf32> to vector<1x1x256xf32>
    %23 = vector.broadcast %22 : vector<1x1x256xf32> to vector<1x256x256xf32>
    %24 = arith.subf %20, %23 : vector<1x256x256xf32>
    %25 = math.exp %24 : vector<1x256x256xf32>
    %cst_18 = arith.constant dense<0.000000e+00> : vector<1x256xf32>
    %26 = vector.multi_reduction <add>, %25, %cst_18 [1] : vector<1x256x256xf32> to vector<1x256xf32>
    %27 = vector.shape_cast %26 : vector<1x256xf32> to vector<1x1x256xf32>
    %28 = tpu.reciprocal %27 {approx = true} : vector<1x1x256xf32> -> vector<1x1x256xf32>
    %29 = arith.truncf %25 : vector<1x256x256xf32> to vector<1x256x256xbf16>
    %30 = vector.broadcast %28 : vector<1x1x256xf32> to vector<1x4x256xf32>
    %31 = arith.mulf %19, %30 : vector<1x4x256xf32>
    %32 = arith.truncf %31 : vector<1x4x256xf32> to vector<1x4x256xbf16>
    %cst_19 = arith.constant dense<0.000000e+00> : vector<1x4x256xf32>
    %33 = tpu.matmul %32, %29, %cst_19 {dimension_numbers = #tpu.dot_dimension_numbers<[2], [2], [1], [1], [0, 0, 0, 1, 1, 1], [0], [0]>} : vector<1x4x256xbf16>, vector<1x256x256xbf16>, vector<1x4x256xf32> -> vector<1x4x256xf32>
    %34 = vector.shape_cast %33 : vector<1x4x256xf32> to vector<4x256xf32>
    %c0_20 = arith.constant 0 : index
    %c0_21 = arith.constant 0 : index
    %35 = vector.load %arg8[%c0_20, %c0_21] : memref<4x4xf32, #tpu.memory_space<vmem>>, vector<4x4xf32>
    %cst_22 = arith.constant dense<0.000000e+00> : vector<4x256xf32>
    %36 = tpu.matmul %35, %34, %cst_22 {dimension_numbers = #tpu.dot_dimension_numbers<[1], [0], [0], [1], [0, 0, 1, 1], [], []>} : vector<4x4xf32>, vector<4x256xf32>, vector<4x256xf32> -> vector<4x256xf32>
    %c0_23 = arith.constant 0 : index
    %c0_24 = arith.constant 0 : index
    %37 = vector.load %arg9[%c0_23, %c0_24] : memref<4x1xf32, #tpu.memory_space<vmem>>, vector<4x1xf32>
    %38 = vector.broadcast %37 : vector<4x1xf32> to vector<4x256xf32>
    %39 = arith.addf %36, %38 : vector<4x256xf32>
    %40 = arith.addf %39, %1 : vector<4x256xf32>
    %c0_25 = arith.constant 0 : index
    %c0_26 = arith.constant 0 : index
    %c0_27 = arith.constant 0 : index
    %41 = vector.load %arg10[%c0_25, %c0_26, %c0_27] : memref<1x4x256xf32, #tpu.memory_space<vmem>>, vector<1x4x256xf32>
    %42 = vector.shape_cast %41 : vector<1x4x256xf32> to vector<4x256xf32>
    %43 = vector.shape_cast %40 : vector<4x256xf32> to vector<1x4x256xf32>
    tpu.vector_store %arg10[%c0_25, %c0_26, %c0_27], %43 {strides = array<i32>} : memref<1x4x256xf32, #tpu.memory_space<vmem>>, vector<1x4x256xf32>,
    return
  }
  func.func @transform_0(%arg0: i32) -> (i32, i32, i32) {
    %c0_i32 = arith.constant 0 : i32
    %c0_i32_0 = arith.constant 0 : i32
    %c0_i32_1 = arith.constant 0 : i32
    return %arg0, %c0_i32, %c0_i32_0 : i32, i32, i32
  }
  func.func @transform_1(%arg0: i32) -> (i32, i32) {
    %c0_i32 = arith.constant 0 : i32
    %c0_i32_0 = arith.constant 0 : i32
    %c0_i32_1 = arith.constant 0 : i32
    return %c0_i32, %c0_i32_0 : i32, i32
  }
  func.func @transform_2(%arg0: i32) -> (i32, i32) {
    %c0_i32 = arith.constant 0 : i32
    %c0_i32_0 = arith.constant 0 : i32
    %c0_i32_1 = arith.constant 0 : i32
    return %c0_i32, %c0_i32_0 : i32, i32
  }
  func.func @transform_3(%arg0: i32) -> (i32, i32) {
    %c0_i32 = arith.constant 0 : i32
    %c0_i32_0 = arith.constant 0 : i32
    %c0_i32_1 = arith.constant 0 : i32
    return %c0_i32, %c0_i32_0 : i32, i32
  }
  func.func @transform_4(%arg0: i32) -> (i32, i32) {
    %c0_i32 = arith.constant 0 : i32
    %c0_i32_0 = arith.constant 0 : i32
    %c0_i32_1 = arith.constant 0 : i32
    return %c0_i32, %c0_i32_0 : i32, i32
  }
  func.func @transform_5(%arg0: i32) -> (i32, i32) {
    %c0_i32 = arith.constant 0 : i32
    %c0_i32_0 = arith.constant 0 : i32
    %c0_i32_1 = arith.constant 0 : i32
    return %c0_i32, %c0_i32_0 : i32, i32
  }
  func.func @transform_6(%arg0: i32) -> (i32, i32) {
    %c0_i32 = arith.constant 0 : i32
    %c0_i32_0 = arith.constant 0 : i32
    %c0_i32_1 = arith.constant 0 : i32
    return %c0_i32, %c0_i32_0 : i32, i32
  }
  func.func @transform_7(%arg0: i32) -> (i32, i32) {
    %c0_i32 = arith.constant 0 : i32
    %c0_i32_0 = arith.constant 0 : i32
    %c0_i32_1 = arith.constant 0 : i32
    return %c0_i32, %c0_i32_0 : i32, i32
  }
  func.func @transform_8(%arg0: i32) -> (i32, i32) {
    %c0_i32 = arith.constant 0 : i32
    %c0_i32_0 = arith.constant 0 : i32
    %c0_i32_1 = arith.constant 0 : i32
    return %c0_i32, %c0_i32_0 : i32, i32
  }
  func.func @transform_9(%arg0: i32) -> (i32, i32, i32) {
    %c0_i32 = arith.constant 0 : i32
    %c0_i32_0 = arith.constant 0 : i32
    %c0_i32_1 = arith.constant 0 : i32
    return %arg0, %c0_i32, %c0_i32_0 : i32, i32, i32
  }
}

</mosaic_0001>

<llo_original>
// kernel: tpu_custom_call.1
$region0: #{tpu_custom_call.1}
  #allocation0 [shape = 'u32[]', space=smem, size = 0x4, offset = 0x4, fixed_abs, tag = 'smem constant byte address 0x4 - core index']
  #allocation1 [shape = 'u32[144,128]{1,0:T(1,128)}', space=vmem, size = 0x12000, scoped, tag = 'internal scratch']
  %s0 = inlined_call_operand.vmem [shape: f32[2,4,256], index: 0, kind: input, shape index: {}]
  %s1 = inlined_call_operand.vmem [shape: f32[4,4], index: 1, kind: input, shape index: {}]
  %s2 = inlined_call_operand.hbm [shape: f32[4,4], index: 2, kind: input, shape index: {}]
  %s3 = inlined_call_operand.vmem [shape: f32[4,4], index: 3, kind: input, shape index: {}]
  %s4 = inlined_call_operand.vmem [shape: f32[4,1], index: 4, kind: input, shape index: {}]
  %s5 = inlined_call_operand.vmem [shape: f32[4,1], index: 5, kind: input, shape index: {}]
  %s6 = inlined_call_operand.vmem [shape: f32[4,1], index: 6, kind: input, shape index: {}]
  %s7 = inlined_call_operand.vmem [shape: f32[4,4], index: 7, kind: input, shape index: {}]
  %s8 = inlined_call_operand.vmem [shape: f32[4,1], index: 8, kind: input, shape index: {}]
  %s9 = inlined_call_operand.hbm [shape: f32[2,4,256], index: 9, kind: output, shape index: {}]
  %s10 = sld [smem:[#allocation0]]
  $region73: #{tpu_custom_call.1} parent=0
    _
  %s12 = ssub.s32 1, %s10
  %s13 = scalar_select 0, %s12, %s10
  $region1: #{tpu_custom_call.1} parent=0
    #allocation2 [shape = 'u8[2048]{0}', space=vmem, size = 0x800, scoped, tag = 'input window, operand 2, single buffered']
    #allocation3 [shape = 's32[2]{0}', space=sflag, size = 0x8, scoped, tag = 'scoped memory for tpu_custom_call.1']
    #allocation4 [shape = 's32[2]{0}', space=sflag, size = 0x8, scoped, tag = 'scoped memory for tpu_custom_call.1']
    #allocation5 [shape = 'u8[8192]{0}', space=vmem, size = 0x2000, scoped, tag = 'output window, operand 0']
    %14 = vsyncpa [#allocation3], 0
    %15 = vsyncpa [#allocation4], 0
    %s16 = scalar_lea.sflag [#allocation4], 1
    %17 = vsyncpa %s16, 0
    loop: start=0, step=1, limit=4
    $region2: #{tpu_custom_call.1} parent=1 // loop_pre_header
      _
    $region3: #{tpu_custom_call.1} parent=1 // loop_header
      %s19 = sphi 0, %s23
      %p20 = scmp.ge.s32.totalorder %s19, 4
      %s29 = sphi 0, %s31
      %s32 = sphi 0, %s29
      %s33 = sphi 0, %s32
      %s49 = sphi 0, %s33
      %s53 = sphi 0, %s53
      %s55 = sphi 0, %s53
      %s56 = sphi 0, %s55
      %s70 = sphi 0, %s56
      %s74 = sphi 0, %s74
      %s76 = sphi 0, %s74
      %s77 = sphi 0, %s76
      %s91 = sphi 0, %s77
      %s95 = sphi 0, %s95
      %s97 = sphi 0, %s95
      %s98 = sphi 0, %s97
      %s112 = sphi 0, %s98
      %s116 = sphi 0, %s116
      %s118 = sphi 0, %s116
      %s119 = sphi 0, %s118
      %s133 = sphi 0, %s119
      %s137 = sphi 0, %s137
      %s139 = sphi 0, %s137
      %s140 = sphi 0, %s139
      %s154 = sphi 0, %s140
      %s158 = sphi 0, %s158
      %s160 = sphi 0, %s158
      %s161 = sphi 0, %s160
      %s175 = sphi 0, %s161
      %s179 = sphi 0, %s179
      %s181 = sphi 0, %s179
      %s182 = sphi 0, %s181
      %s196 = sphi 0, %s182
      %s200 = sphi 0, %s200
      %s202 = sphi 0, %s200
      %s203 = sphi 0, %s202
      %s217 = sphi 0, %s203
      %s223 = sphi 0, %s225
      %s226 = sphi 0, %s223
      %s227 = sphi 0, %s226
      %s243 = sphi 0, %s227
    $region4: #{tpu_custom_call.1} parent=1 // loop_header_branch
      %22 = sbr.rel (%p20) target = $region8
    $region5: #{tpu_custom_call.1} parent=1 // loop_body
      %s24 = ssub.s32 %s19, 1
      %s25 = ssub.s32 %s19, 2
      %s26 = sadd.s32 %s19, 1
      %s27 = ssub.s32 %s19, %s26
      %p28 = scmp.eq.s32.totalorder %s27, 0
      %s30 = sadd.s32 %s29, 1
      %s31 = scalar_select %p28, %s29, %s30
      %p34 = pneg %p28
      %p35 = scmp.eq.s32.totalorder %s19, 1
      %p36 = por %p34, %p35
      %p37 = scmp.ne.s32.totalorder %s29, %s32
      %p38 = scmp.eq.s32.totalorder %s19, 0
      %p39 = por %p37, %p38
      %p40 = scmp.ne.s32.totalorder %s29, %s32
      %p41 = scmp.eq.s32.totalorder %s24, 1
      %p42 = por %p40, %p41
      %p43 = scmp.ne.s32.totalorder %s32, %s33
      %p44 = scmp.eq.s32.totalorder %s24, 0
      %p45 = por %p43, %p44
      %p46 = scmp.ne.s32.totalorder %s32, %s33
      %p47 = scmp.eq.s32.totalorder %s25, 1
      %p48 = por %p46, %p47
      %p50 = scmp.ne.s32.totalorder %s33, %s49
      %p51 = scmp.eq.s32.totalorder %s25, 0
      %p52 = por %p50, %p51
      %s54 = sadd.s32 %s53, 1
      %p57 = scmp.eq.s32.totalorder %s19, 1
      %p58 = scmp.ne.s32.totalorder %s53, %s55
      %p59 = scmp.eq.s32.totalorder %s19, 0
      %p60 = por %p58, %p59
      %p61 = scmp.ne.s32.totalorder %s53, %s55
      %p62 = scmp.eq.s32.totalorder %s24, 1
      %p63 = por %p61, %p62
      %p64 = scmp.ne.s32.totalorder %s55, %s56
      %p65 = scmp.eq.s32.totalorder %s24, 0
      %p66 = por %p64, %p65
      %p67 = scmp.ne.s32.totalorder %s55, %s56
      %p68 = scmp.eq.s32.totalorder %s25, 1
      %p69 = por %p67, %p68
      %p71 = scmp.ne.s32.totalorder %s56, %s70
      %p72 = scmp.eq.s32.totalorder %s25, 0
      %p73 = por %p71, %p72
      %s75 = sadd.s32 %s74, 1
      %p78 = scmp.eq.s32.totalorder %s19, 1
      %p79 = scmp.ne.s32.totalorder %s74, %s76
      %p80 = scmp.eq.s32.totalorder %s19, 0
      %p81 = por %p79, %p80
      %p82 = scmp.ne.s32.totalorder %s74, %s76
      %p83 = scmp.eq.s32.totalorder %s24, 1
      %p84 = por %p82, %p83
      %p85 = scmp.ne.s32.totalorder %s76, %s77
      %p86 = scmp.eq.s32.totalorder %s24, 0
      %p87 = por %p85, %p86
      %p88 = scmp.ne.s32.totalorder %s76, %s77
      %p89 = scmp.eq.s32.totalorder %s25, 1
      %p90 = por %p88, %p89
      %p92 = scmp.ne.s32.totalorder %s77, %s91
      %p93 = scmp.eq.s32.totalorder %s25, 0
      %p94 = por %p92, %p93
      %s96 = sadd.s32 %s95, 1
      %p99 = scmp.eq.s32.totalorder %s19, 1
      %p100 = scmp.ne.s32.totalorder %s95, %s97
      %p101 = scmp.eq.s32.totalorder %s19, 0
      %p102 = por %p100, %p101
      %p103 = scmp.ne.s32.totalorder %s95, %s97
      %p104 = scmp.eq.s32.totalorder %s24, 1
      %p105 = por %p103, %p104
      %p106 = scmp.ne.s32.totalorder %s97, %s98
      %p107 = scmp.eq.s32.totalorder %s24, 0
      %p108 = por %p106, %p107
      %p109 = scmp.ne.s32.totalorder %s97, %s98
      %p110 = scmp.eq.s32.totalorder %s25, 1
      %p111 = por %p109, %p110
      %p113 = scmp.ne.s32.totalorder %s98, %s112
      %p114 = scmp.eq.s32.totalorder %s25, 0
      %p115 = por %p113, %p114
      %s117 = sadd.s32 %s116, 1
      %p120 = scmp.eq.s32.totalorder %s19, 1
      %p121 = scmp.ne.s32.totalorder %s116, %s118
      %p122 = scmp.eq.s32.totalorder %s19, 0
      %p123 = por %p121, %p122
      %p124 = scmp.ne.s32.totalorder %s116, %s118
      %p125 = scmp.eq.s32.totalorder %s24, 1
      %p126 = por %p124, %p125
      %p127 = scmp.ne.s32.totalorder %s118, %s119
      %p128 = scmp.eq.s32.totalorder %s24, 0
      %p129 = por %p127, %p128
      %p130 = scmp.ne.s32.totalorder %s118, %s119
      %p131 = scmp.eq.s32.totalorder %s25, 1
      %p132 = por %p130, %p131
      %p134 = scmp.ne.s32.totalorder %s119, %s133
      %p135 = scmp.eq.s32.totalorder %s25, 0
      %p136 = por %p134, %p135
      %s138 = sadd.s32 %s137, 1
      %p141 = scmp.eq.s32.totalorder %s19, 1
      %p142 = scmp.ne.s32.totalorder %s137, %s139
      %p143 = scmp.eq.s32.totalorder %s19, 0
      %p144 = por %p142, %p143
      %p145 = scmp.ne.s32.totalorder %s137, %s139
      %p146 = scmp.eq.s32.totalorder %s24, 1
      %p147 = por %p145, %p146
      %p148 = scmp.ne.s32.totalorder %s139, %s140
      %p149 = scmp.eq.s32.totalorder %s24, 0
      %p150 = por %p148, %p149
      %p151 = scmp.ne.s32.totalorder %s139, %s140
      %p152 = scmp.eq.s32.totalorder %s25, 1
      %p153 = por %p151, %p152
      %p155 = scmp.ne.s32.totalorder %s140, %s154
      %p156 = scmp.eq.s32.totalorder %s25, 0
      %p157 = por %p155, %p156
      %s159 = sadd.s32 %s158, 1
      %p162 = scmp.eq.s32.totalorder %s19, 1
      %p163 = scmp.ne.s32.totalorder %s158, %s160
      %p164 = scmp.eq.s32.totalorder %s19, 0
      %p165 = por %p163, %p164
      %p166 = scmp.ne.s32.totalorder %s158, %s160
      %p167 = scmp.eq.s32.totalorder %s24, 1
      %p168 = por %p166, %p167
      %p169 = scmp.ne.s32.totalorder %s160, %s161
      %p170 = scmp.eq.s32.totalorder %s24, 0
      %p171 = por %p169, %p170
      %p172 = scmp.ne.s32.totalorder %s160, %s161
      %p173 = scmp.eq.s32.totalorder %s25, 1
      %p174 = por %p172, %p173
      %p176 = scmp.ne.s32.totalorder %s161, %s175
      %p177 = scmp.eq.s32.totalorder %s25, 0
      %p178 = por %p176, %p177
      %s180 = sadd.s32 %s179, 1
      %p183 = scmp.eq.s32.totalorder %s19, 1
      %p184 = scmp.ne.s32.totalorder %s179, %s181
      %p185 = scmp.eq.s32.totalorder %s19, 0
      %p186 = por %p184, %p185
      %p187 = scmp.ne.s32.totalorder %s179, %s181
      %p188 = scmp.eq.s32.totalorder %s24, 1
      %p189 = por %p187, %p188
      %p190 = scmp.ne.s32.totalorder %s181, %s182
      %p191 = scmp.eq.s32.totalorder %s24, 0
      %p192 = por %p190, %p191
      %p193 = scmp.ne.s32.totalorder %s181, %s182
      %p194 = scmp.eq.s32.totalorder %s25, 1
      %p195 = por %p193, %p194
      %p197 = scmp.ne.s32.totalorder %s182, %s196
      %p198 = scmp.eq.s32.totalorder %s25, 0
      %p199 = por %p197, %p198
      %s201 = sadd.s32 %s200, 1
      %p204 = scmp.eq.s32.totalorder %s19, 1
      %p205 = scmp.ne.s32.totalorder %s200, %s202
      %p206 = scmp.eq.s32.totalorder %s19, 0
      %p207 = por %p205, %p206
      %p208 = scmp.ne.s32.totalorder %s200, %s202
      %p209 = scmp.eq.s32.totalorder %s24, 1
      %p210 = por %p208, %p209
      %p211 = scmp.ne.s32.totalorder %s202, %s203
      %p212 = scmp.eq.s32.totalorder %s24, 0
      %p213 = por %p211, %p212
      %p214 = scmp.ne.s32.totalorder %s202, %s203
      %p215 = scmp.eq.s32.totalorder %s25, 1
      %p216 = por %p214, %p215
      %p218 = scmp.ne.s32.totalorder %s203, %s217
      %p219 = scmp.eq.s32.totalorder %s25, 0
      %p220 = por %p218, %p219
      %s221 = ssub.s32 %s19, %s26
      %p222 = scmp.eq.s32.totalorder %s221, 0
      %s224 = sadd.s32 %s223, 1
      %s225 = scalar_select %p222, %s223, %s224
      %p228 = pneg %p222
      %p229 = scmp.eq.s32.totalorder %s19, 1
      %p230 = por %p228, %p229
      %p231 = scmp.ne.s32.totalorder %s223, %s226
      %p232 = scmp.eq.s32.totalorder %s19, 0
      %p233 = por %p231, %p232
      %p234 = scmp.ne.s32.totalorder %s223, %s226
      %p235 = scmp.eq.s32.totalorder %s24, 1
      %p236 = por %p234, %p235
      %p237 = scmp.ne.s32.totalorder %s226, %s227
      %p238 = scmp.eq.s32.totalorder %s24, 0
      %p239 = por %p237, %p238
      %p240 = scmp.ne.s32.totalorder %s226, %s227
      %p241 = scmp.eq.s32.totalorder %s25, 1
      %p242 = por %p240, %p241
      %p244 = scmp.ne.s32.totalorder %s227, %s243
      %p245 = scmp.eq.s32.totalorder %s25, 0
      %p246 = por %p244, %p245
      %p247 = scmp.le.s32.totalorder 1, %s19
      %p248 = scmp.lt.s32.totalorder %s19, 3
      %p249 = pnand %p247, %p248
      %p250 = pneg %p249
      // Predicated region
      $region9: #{tpu_custom_call.1} parent=5 // pred_check
        _
      $region10: #{tpu_custom_call.1} parent=5 // pred_check_branch
        %252 = sbr.rel (%p249) target = $region12
      $region11: #{tpu_custom_call.1} parent=5 // pred_region
        %s253 = ssub.s32 %s19, 1
        // Predicated region
        $region13: #{tpu_custom_call.1} parent=11 // pred_check
          %p254 = pneg %p66
        $region14: #{tpu_custom_call.1} parent=11 // pred_check_branch
          %256 = sbr.rel (%p254) target = $region16
        $region15: #{tpu_custom_call.1} parent=11 // pred_region
          _
        $region16: #{tpu_custom_call.1} parent=11 // pred_fallthru
          _
        // Predicated region
        $region17: #{tpu_custom_call.1} parent=11 // pred_check
          %p257 = pneg %p87
        $region18: #{tpu_custom_call.1} parent=11 // pred_check_branch
          %259 = sbr.rel (%p257) target = $region20
        $region19: #{tpu_custom_call.1} parent=11 // pred_region
          %s261 = ssub.s32 64, 64
          %262 = vsyncadd [#allocation3], %s261
          %s264 = sshll.u32 [#allocation2], 4
          %s265 = int_to_ptr.vmem [resolvable:$true] %s264
          %267 = dma.hbm_to_vmem [thread:$0]  %s2, 64, %s265, [#allocation3]
        $region20: #{tpu_custom_call.1} parent=11 // pred_fallthru
          _
        // Predicated region
        $region21: #{tpu_custom_call.1} parent=11 // pred_check
          %p268 = pneg %p108
        $region22: #{tpu_custom_call.1} parent=11 // pred_check_branch
          %270 = sbr.rel (%p268) target = $region24
        $region23: #{tpu_custom_call.1} parent=11 // pred_region
          _
        $region24: #{tpu_custom_call.1} parent=11 // pred_fallthru
          _
        // Predicated region
        $region25: #{tpu_custom_call.1} parent=11 // pred_check
          %p271 = pneg %p129
        $region26: #{tpu_custom_call.1} parent=11 // pred_check_branch
          %273 = sbr.rel (%p271) target = $region28
        $region27: #{tpu_custom_call.1} parent=11 // pred_region
          _
        $region28: #{tpu_custom_call.1} parent=11 // pred_fallthru
          _
        // Predicated region
        $region29: #{tpu_custom_call.1} parent=11 // pred_check
          %p274 = pneg %p150
        $region30: #{tpu_custom_call.1} parent=11 // pred_check_branch
          %276 = sbr.rel (%p274) target = $region32
        $region31: #{tpu_custom_call.1} parent=11 // pred_region
          _
        $region32: #{tpu_custom_call.1} parent=11 // pred_fallthru
          _
        // Predicated region
        $region33: #{tpu_custom_call.1} parent=11 // pred_check
          %p277 = pneg %p171
        $region34: #{tpu_custom_call.1} parent=11 // pred_check_branch
          %279 = sbr.rel (%p277) target = $region36
        $region35: #{tpu_custom_call.1} parent=11 // pred_region
          _
        $region36: #{tpu_custom_call.1} parent=11 // pred_fallthru
          _
        // Predicated region
        $region37: #{tpu_custom_call.1} parent=11 // pred_check
          %p280 = pneg %p192
        $region38: #{tpu_custom_call.1} parent=11 // pred_check_branch
          %282 = sbr.rel (%p280) target = $region40
        $region39: #{tpu_custom_call.1} parent=11 // pred_region
          _
        $region40: #{tpu_custom_call.1} parent=11 // pred_fallthru
          _
        // Predicated region
        $region41: #{tpu_custom_call.1} parent=11 // pred_check
          %p283 = pneg %p213
        $region42: #{tpu_custom_call.1} parent=11 // pred_check_branch
          %285 = sbr.rel (%p283) target = $region44
        $region43: #{tpu_custom_call.1} parent=11 // pred_region
          _
        $region44: #{tpu_custom_call.1} parent=11 // pred_fallthru
          _
      $region12: #{tpu_custom_call.1} parent=5 // pred_fallthru
        _
      %p286 = scmp.lt.s32.totalorder %s19, 2
      // Predicated region
      $region45: #{tpu_custom_call.1} parent=5 // pred_check
        %p287 = pneg %p286
      $region46: #{tpu_custom_call.1} parent=5 // pred_check_branch
        %289 = sbr.rel (%p287) target = $region48
      $region47: #{tpu_custom_call.1} parent=5 // pred_region
        // Predicated region
        $region49: #{tpu_custom_call.1} parent=47 // pred_check
          %p290 = pneg %p39
        $region50: #{tpu_custom_call.1} parent=47 // pred_check_branch
          %292 = sbr.rel (%p290) target = $region52
        $region51: #{tpu_custom_call.1} parent=47 // pred_region
          %p293 = scmp.lt.s32.totalorder %s19, 1
          %s294 = scalar_select %p293, %s19, 1
          %s295 = smul.addr %s294, 2
          %s296 = smul.addr %s295, 4
          %s297 = scalar_lea.vmem %s0, %s296
        $region52: #{tpu_custom_call.1} parent=47 // pred_fallthru
          _
      $region48: #{tpu_custom_call.1} parent=5 // pred_fallthru
        _
      %p298 = scmp.le.s32.totalorder 1, %s19
      %p299 = scmp.lt.s32.totalorder %s19, 3
      %p300 = pnand %p298, %p299
      %p301 = pneg %p300
      // Predicated region
      $region53: #{tpu_custom_call.1} parent=5 // pred_check
        _
      $region54: #{tpu_custom_call.1} parent=5 // pred_check_branch
        %303 = sbr.rel (%p300) target = $region56
      $region55: #{tpu_custom_call.1} parent=5 // pred_region
        %s304 = ssub.s32 %s19, 1
        // Predicated region
        $region57: #{tpu_custom_call.1} parent=55 // pred_check
          %p305 = pneg %p87
        $region58: #{tpu_custom_call.1} parent=55 // pred_check_branch
          %307 = sbr.rel (%p305) target = $region60
        $region59: #{tpu_custom_call.1} parent=55 // pred_region
          %308 = dma.done [#allocation3], 64
        $region60: #{tpu_custom_call.1} parent=55 // pred_fallthru
          _
        %p309 = scmp.lt.s32.totalorder %s24, 1
        %s310 = scalar_select %p309, %s24, 1
        %s311 = smul.addr %s310, 2
        %s312 = smul.addr %s311, 4
        %s313 = scalar_lea.vmem %s0, %s312
        %p314 = pneg %p45
        %p315 = pneg %p42
        %p316 = pneg %p66
        %p317 = pneg %p63
        %p318 = pneg %p87
        %p319 = pneg %p84
        %p320 = pneg %p108
        %p321 = pneg %p105
        %p322 = pneg %p129
        %p323 = pneg %p126
        %p324 = pneg %p150
        %p325 = pneg %p147
        %p326 = pneg %p171
        %p327 = pneg %p168
        %p328 = pneg %p192
        %p329 = pneg %p189
        %p330 = pneg %p213
        %p331 = pneg %p210
        %p332 = pneg %p239
        %p333 = pneg %p236
        %s334 = sand.u32 %s226, 1
        %s335 = scalar_lea.sflag [#allocation4], %s334
        %s336 = sand.u32 %s226, 1
        %s337 = smul.addr %s336, 8
        %s338 = scalar_lea.vmem [#allocation5], %s337
        %p339 = scmp.lt.s32.totalorder %s24, 1
        %s340 = scalar_select %p339, %s24, 1
        %s341 = smul.addr %s340, 2
        %s342 = smul.addr %s341, 4
        %s343 = scalar_lea.vmem %s0, %s342
        %v344 = vld [vmem:[%s343] sm:$0xff]
        %v345 = vld [vmem:[%s1] sm:$0xf]
        %v346 = vld [vmem:[%s4] sm:$0xf]
        %348 = vset.pattern.permute.xlu0 0
        %349 = vperm.xlu0 %348, %v346
        %v350 = vpop.permute.xlu0 %349
        %v353 = vcombine.high %v344, %v344
        %vm354 = vcmask 31744
        %v356 = vsel %vm354, %v345, 0
        %vm358 = vcmask 1043456
        %v359 = vsel %vm358, %v344, 0
        %v361 = vsel %vm358, %v353, 0
        %363 = vmatprep.subr.mxu0 0.0
        %364 = vmatpush1.msra.mxu0 0.0
        %365 = vmatprep.subr.mxu0 0.0
        %366 = vmatpush1.msra.mxu0 0.0
        %367 = vmatprep.subr.mxu0 0.0
        %368 = vmatpush1.msra.mxu0 0.0
        %369 = vmatprep.subr.mxu0 0.0
        %370 = vmatpush1.msra.mxu0 0.0
        %371 = vmatprep.subr.mxu0 0.0
        %372 = vmatpush1.msra.mxu0 0.0
        %373 = vmatprep.subr.mxu0 0.0
        %374 = vmatpush1.msra.mxu0 0.0
        %375 = vmatprep.subr.mxu0 0.0
        %376 = vmatpush1.msra.mxu0 0.0
        %377 = vmatprep.subr.mxu0 0.0
        %378 = vmatpush1.msra.mxu0 0.0
        %379 = vmatprep.subr.mxu0 0.0
        %380 = vmatpush1.msra.mxu0 0.0
        %381 = vmatprep.subr.mxu0 0.0
        %382 = vmatpush1.msra.mxu0 0.0
        %383 = vmatprep.subr.mxu0 0.0
        %384 = vmatpush1.msra.mxu0 0.0
        %385 = vmatprep.subr.mxu0 0.0
        %386 = vmatpush1.msra.mxu0 0.0
        %387 = vmatprep.subr.mxu0 0.0
        %388 = vmatpush1.msra.mxu0 0.0
        %389 = vmatprep.subr.mxu0 0.0
        %390 = vmatpush1.msra.mxu0 0.0
        %391 = vmatprep.subr.mxu0 0.0
        %392 = vmatpush1.msra.mxu0 0.0
        %393 = vmatprep.subr.mxu0 %v361
        %394 = vmatpush1.msra.mxu0 %v359
        %395 = vmatprep.subr.mxu0 0.0
        %396 = vmatpush2.msra.mxu0 0.0
        %397 = vmatprep.subr.mxu0 0.0
        %398 = vmatpush2.msra.mxu0 0.0
        %399 = vmatprep.subr.mxu0 0.0
        %400 = vmatpush2.msra.mxu0 0.0
        %401 = vmatprep.subr.mxu0 0.0
        %402 = vmatpush2.msra.mxu0 0.0
        %403 = vmatprep.subr.mxu0 0.0
        %404 = vmatpush2.msra.mxu0 0.0
        %405 = vmatprep.subr.mxu0 0.0
        %406 = vmatpush2.msra.mxu0 0.0
        %407 = vmatprep.subr.mxu0 0.0
        %408 = vmatpush2.msra.mxu0 0.0
        %409 = vmatprep.subr.mxu0 0.0
        %410 = vmatpush2.msra.mxu0 0.0
        %411 = vmatprep.subr.mxu0 0.0
        %412 = vmatpush2.msra.mxu0 0.0
        %413 = vmatprep.subr.mxu0 0.0
        %414 = vmatpush2.msra.mxu0 0.0
        %415 = vmatprep.subr.mxu0 0.0
        %416 = vmatpush2.msra.mxu0 0.0
        %417 = vmatprep.subr.mxu0 0.0
        %418 = vmatpush2.msra.mxu0 0.0
        %419 = vmatprep.subr.mxu0 0.0
        %420 = vmatpush2.msra.mxu0 0.0
        %421 = vmatprep.subr.mxu0 0.0
        %422 = vmatpush2.msra.mxu0 0.0
        %423 = vmatprep.subr.mxu0 0.0
        %424 = vmatpush2.msra.mxu0 0.0
        %425 = vmatprep.subr.mxu0 0.0
        %426 = vmatpush2.msra.mxu0 0.0
        %427 = vmatprep.mubr.f32.mxu0 0.0
        %428 = vmatmul.mubr.f32.gmra.mxu0 %v356
        %v429 = vpop.f32.mrf.mxu0
        %v430 = vadd.f32 %v350, %v429
        %v431 = vpop.f32.mrf.mxu0
        %v432 = vadd.f32 %v350, %v431
        %433 = vdwg.mxu0
        %v434 = vld [vmem:[#allocation2] sm:$0xf]
        %v435 = vld [vmem:[%s5] sm:$0xf]
        %437 = vset.pattern.permute.xlu0 0
        %438 = vperm.xlu0 %437, %v435
        %v439 = vpop.permute.xlu0 %438
        %v442 = vsel %vm354, %v434, 0
        %444 = vmatprep.subr.mxu0 0.0
        %445 = vmatpush1.msra.mxu0 0.0
        %446 = vmatprep.subr.mxu0 0.0
        %447 = vmatpush1.msra.mxu0 0.0
        %448 = vmatprep.subr.mxu0 0.0
        %449 = vmatpush1.msra.mxu0 0.0
        %450 = vmatprep.subr.mxu0 0.0
        %451 = vmatpush1.msra.mxu0 0.0
        %452 = vmatprep.subr.mxu0 0.0
        %453 = vmatpush1.msra.mxu0 0.0
        %454 = vmatprep.subr.mxu0 0.0
        %455 = vmatpush1.msra.mxu0 0.0
        %456 = vmatprep.subr.mxu0 0.0
        %457 = vmatpush1.msra.mxu0 0.0
        %458 = vmatprep.subr.mxu0 0.0
        %459 = vmatpush1.msra.mxu0 0.0
        %460 = vmatprep.subr.mxu0 0.0
        %461 = vmatpush1.msra.mxu0 0.0
        %462 = vmatprep.subr.mxu0 0.0
        %463 = vmatpush1.msra.mxu0 0.0
        %464 = vmatprep.subr.mxu0 0.0
        %465 = vmatpush1.msra.mxu0 0.0
        %466 = vmatprep.subr.mxu0 0.0
        %467 = vmatpush1.msra.mxu0 0.0
        %468 = vmatprep.subr.mxu0 0.0
        %469 = vmatpush1.msra.mxu0 0.0
        %470 = vmatprep.subr.mxu0 0.0
        %471 = vmatpush1.msra.mxu0 0.0
        %472 = vmatprep.subr.mxu0 0.0
        %473 = vmatpush1.msra.mxu0 0.0
        %474 = vmatprep.subr.mxu0 %v361
        %475 = vmatpush1.msra.mxu0 %v359
        %476 = vmatprep.subr.mxu0 0.0
        %477 = vmatpush2.msra.mxu0 0.0
        %478 = vmatprep.subr.mxu0 0.0
        %479 = vmatpush2.msra.mxu0 0.0
        %480 = vmatprep.subr.mxu0 0.0
        %481 = vmatpush2.msra.mxu0 0.0
        %482 = vmatprep.subr.mxu0 0.0
        %483 = vmatpush2.msra.mxu0 0.0
        %484 = vmatprep.subr.mxu0 0.0
        %485 = vmatpush2.msra.mxu0 0.0
        %486 = vmatprep.subr.mxu0 0.0
        %487 = vmatpush2.msra.mxu0 0.0
        %488 = vmatprep.subr.mxu0 0.0
        %489 = vmatpush2.msra.mxu0 0.0
        %490 = vmatprep.subr.mxu0 0.0
        %491 = vmatpush2.msra.mxu0 0.0
        %492 = vmatprep.subr.mxu0 0.0
        %493 = vmatpush2.msra.mxu0 0.0
        %494 = vmatprep.subr.mxu0 0.0
        %495 = vmatpush2.msra.mxu0 0.0
        %496 = vmatprep.subr.mxu0 0.0
        %497 = vmatpush2.msra.mxu0 0.0
        %498 = vmatprep.subr.mxu0 0.0
        %499 = vmatpush2.msra.mxu0 0.0
        %500 = vmatprep.subr.mxu0 0.0
        %501 = vmatpush2.msra.mxu0 0.0
        %502 = vmatprep.subr.mxu0 0.0
        %503 = vmatpush2.msra.mxu0 0.0
        %504 = vmatprep.subr.mxu0 0.0
        %505 = vmatpush2.msra.mxu0 0.0
        %506 = vmatprep.subr.mxu0 0.0
        %507 = vmatpush2.msra.mxu0 0.0
        %508 = vmatprep.mubr.f32.mxu0 0.0
        %509 = vmatmul.mubr.f32.gmra.mxu0 %v442
        %v510 = vpop.f32.mrf.mxu0
        %v511 = vadd.f32 %v439, %v510
        %v512 = vpop.f32.mrf.mxu0
        %v513 = vadd.f32 %v439, %v512
        %514 = vdwg.mxu0
        %v515 = vld [vmem:[%s3] sm:$0xf]
        %v516 = vld [vmem:[%s6] sm:$0xf]
        %518 = vset.pattern.permute.xlu0 0
        %519 = vperm.xlu0 %518, %v516
        %v520 = vpop.permute.xlu0 %519
        %v523 = vsel %vm354, %v515, 0
        %525 = vmatprep.subr.mxu0 0.0
        %526 = vmatpush1.msra.mxu0 0.0
        %527 = vmatprep.subr.mxu0 0.0
        %528 = vmatpush1.msra.mxu0 0.0
        %529 = vmatprep.subr.mxu0 0.0
        %530 = vmatpush1.msra.mxu0 0.0
        %531 = vmatprep.subr.mxu0 0.0
        %532 = vmatpush1.msra.mxu0 0.0
        %533 = vmatprep.subr.mxu0 0.0
        %534 = vmatpush1.msra.mxu0 0.0
        %535 = vmatprep.subr.mxu0 0.0
        %536 = vmatpush1.msra.mxu0 0.0
        %537 = vmatprep.subr.mxu0 0.0
        %538 = vmatpush1.msra.mxu0 0.0
        %539 = vmatprep.subr.mxu0 0.0
        %540 = vmatpush1.msra.mxu0 0.0
        %541 = vmatprep.subr.mxu0 0.0
        %542 = vmatpush1.msra.mxu0 0.0
        %543 = vmatprep.subr.mxu0 0.0
        %544 = vmatpush1.msra.mxu0 0.0
        %545 = vmatprep.subr.mxu0 0.0
        %546 = vmatpush1.msra.mxu0 0.0
        %547 = vmatprep.subr.mxu0 0.0
        %548 = vmatpush1.msra.mxu0 0.0
        %549 = vmatprep.subr.mxu0 0.0
        %550 = vmatpush1.msra.mxu0 0.0
        %551 = vmatprep.subr.mxu0 0.0
        %552 = vmatpush1.msra.mxu0 0.0
        %553 = vmatprep.subr.mxu0 0.0
        %554 = vmatpush1.msra.mxu0 0.0
        %555 = vmatprep.subr.mxu0 %v361
        %556 = vmatpush1.msra.mxu0 %v359
        %557 = vmatprep.subr.mxu0 0.0
        %558 = vmatpush2.msra.mxu0 0.0
        %559 = vmatprep.subr.mxu0 0.0
        %560 = vmatpush2.msra.mxu0 0.0
        %561 = vmatprep.subr.mxu0 0.0
        %562 = vmatpush2.msra.mxu0 0.0
        %563 = vmatprep.subr.mxu0 0.0
        %564 = vmatpush2.msra.mxu0 0.0
        %565 = vmatprep.subr.mxu0 0.0
        %566 = vmatpush2.msra.mxu0 0.0
        %567 = vmatprep.subr.mxu0 0.0
        %568 = vmatpush2.msra.mxu0 0.0
        %569 = vmatprep.subr.mxu0 0.0
        %570 = vmatpush2.msra.mxu0 0.0
        %571 = vmatprep.subr.mxu0 0.0
        %572 = vmatpush2.msra.mxu0 0.0
        %573 = vmatprep.subr.mxu0 0.0
        %574 = vmatpush2.msra.mxu0 0.0
        %575 = vmatprep.subr.mxu0 0.0
        %576 = vmatpush2.msra.mxu0 0.0
        %577 = vmatprep.subr.mxu0 0.0
        %578 = vmatpush2.msra.mxu0 0.0
        %579 = vmatprep.subr.mxu0 0.0
        %580 = vmatpush2.msra.mxu0 0.0
        %581 = vmatprep.subr.mxu0 0.0
        %582 = vmatpush2.msra.mxu0 0.0
        %583 = vmatprep.subr.mxu0 0.0
        %584 = vmatpush2.msra.mxu0 0.0
        %585 = vmatprep.subr.mxu0 0.0
        %586 = vmatpush2.msra.mxu0 0.0
        %587 = vmatprep.subr.mxu0 0.0
        %588 = vmatpush2.msra.mxu0 0.0
        %589 = vmatprep.mubr.f32.mxu0 0.0
        %590 = vmatmul.mubr.f32.gmra.mxu0 %v523
        %v591 = vpop.f32.mrf.mxu0
        %v592 = vadd.f32 %v520, %v591
        %v593 = vpop.f32.mrf.mxu0
        %v594 = vadd.f32 %v520, %v593
        %595 = vdwg.mxu0
        %596 = vxpose.xlu0.b32.start [1/16] %v430, 128
        %597 = vxpose.xlu0.b32.cont [2/16] 0.0, 128
        %598 = vxpose.xlu0.b32.cont [3/16] 0.0, 128
        %599 = vxpose.xlu0.b32.cont [4/16] 0.0, 128
        %600 = vxpose.xlu0.b32.cont [5/16] 0.0, 128
        %601 = vxpose.xlu0.b32.cont [6/16] 0.0, 128
        %602 = vxpose.xlu0.b32.cont [7/16] 0.0, 128
        %603 = vxpose.xlu0.b32.cont [8/16] 0.0, 128
        %604 = vxpose.xlu0.b32.cont [9/16] 0.0, 128
        %605 = vxpose.xlu0.b32.cont [10/16] 0.0, 128
        %606 = vxpose.xlu0.b32.cont [11/16] 0.0, 128
        %607 = vxpose.xlu0.b32.cont [12/16] 0.0, 128
        %608 = vxpose.xlu0.b32.cont [13/16] 0.0, 128
        %609 = vxpose.xlu0.b32.cont [14/16] 0.0, 128
        %610 = vxpose.xlu0.b32.cont [15/16] 0.0, 128
        %611 = vxpose.xlu0.b32.end [16/16] 0.0, 128
        %v612 = vpop.trf.xlu0
        %v613 = vpop.trf.xlu0
        %v614 = vpop.trf.xlu0
        %v615 = vpop.trf.xlu0
        %v616 = vpop.trf.xlu0
        %v617 = vpop.trf.xlu0
        %v618 = vpop.trf.xlu0
        %v619 = vpop.trf.xlu0
        %v620 = vpop.trf.xlu0
        %v621 = vpop.trf.xlu0
        %v622 = vpop.trf.xlu0
        %v623 = vpop.trf.xlu0
        %v624 = vpop.trf.xlu0
        %v625 = vpop.trf.xlu0
        %v626 = vpop.trf.xlu0
        %v627 = vpop.trf.xlu0
        %628 = vxpose.xlu0.b32.start [1/16] %v432, 128
        %629 = vxpose.xlu0.b32.cont [2/16] 0.0, 128
        %630 = vxpose.xlu0.b32.cont [3/16] 0.0, 128
        %631 = vxpose.xlu0.b32.cont [4/16] 0.0, 128
        %632 = vxpose.xlu0.b32.cont [5/16] 0.0, 128
        %633 = vxpose.xlu0.b32.cont [6/16] 0.0, 128
        %634 = vxpose.xlu0.b32.cont [7/16] 0.0, 128
        %635 = vxpose.xlu0.b32.cont [8/16] 0.0, 128
        %636 = vxpose.xlu0.b32.cont [9/16] 0.0, 128
        %637 = vxpose.xlu0.b32.cont [10/16] 0.0, 128
        %638 = vxpose.xlu0.b32.cont [11/16] 0.0, 128
        %639 = vxpose.xlu0.b32.cont [12/16] 0.0, 128
        %640 = vxpose.xlu0.b32.cont [13/16] 0.0, 128
        %641 = vxpose.xlu0.b32.cont [14/16] 0.0, 128
        %642 = vxpose.xlu0.b32.cont [15/16] 0.0, 128
        %643 = vxpose.xlu0.b32.end [16/16] 0.0, 128
        %v644 = vpop.trf.xlu0
        %v645 = vpop.trf.xlu0
        %v646 = vpop.trf.xlu0
        %v647 = vpop.trf.xlu0
        %v648 = vpop.trf.xlu0
        %v649 = vpop.trf.xlu0
        %v650 = vpop.trf.xlu0
        %v651 = vpop.trf.xlu0
        %v652 = vpop.trf.xlu0
        %v653 = vpop.trf.xlu0
        %v654 = vpop.trf.xlu0
        %v655 = vpop.trf.xlu0
        %v656 = vpop.trf.xlu0
        %v657 = vpop.trf.xlu0
        %v658 = vpop.trf.xlu0
        %v659 = vpop.trf.xlu0
        %v661 = vsel %vm354, %v612, 0
        %v664 = vsel %vm354, %v613, 0
        %v667 = vsel %vm354, %v614, 0
        %v670 = vsel %vm354, %v615, 0
        %v673 = vsel %vm354, %v616, 0
        %v676 = vsel %vm354, %v617, 0
        %v679 = vsel %vm354, %v618, 0
        %v682 = vsel %vm354, %v619, 0
        %v685 = vsel %vm354, %v620, 0
        %v688 = vsel %vm354, %v621, 0
        %v691 = vsel %vm354, %v622, 0
        %v694 = vsel %vm354, %v623, 0
        %v697 = vsel %vm354, %v624, 0
        %v700 = vsel %vm354, %v625, 0
        %v703 = vsel %vm354, %v626, 0
        %v706 = vsel %vm354, %v627, 0
        %v709 = vsel %vm354, %v644, 0
        %v712 = vsel %vm354, %v645, 0
        %v715 = vsel %vm354, %v646, 0
        %v718 = vsel %vm354, %v647, 0
        %v721 = vsel %vm354, %v648, 0
        %v724 = vsel %vm354, %v649, 0
        %v727 = vsel %vm354, %v650, 0
        %v730 = vsel %vm354, %v651, 0
        %v733 = vsel %vm354, %v652, 0
        %v736 = vsel %vm354, %v653, 0
        %v739 = vsel %vm354, %v654, 0
        %v742 = vsel %vm354, %v655, 0
        %v745 = vsel %vm354, %v656, 0
        %v748 = vsel %vm354, %v657, 0
        %v751 = vsel %vm354, %v658, 0
        %v754 = vsel %vm354, %v659, 0
        %v757 = vsel %vm358, %v511, 0
        %v760 = vsel %vm358, %v513, 0
        %762 = vmatprep.subr.mxu0 0.0
        %763 = vmatpush1.msra.mxu0 0.0
        %764 = vmatprep.subr.mxu0 0.0
        %765 = vmatpush1.msra.mxu0 0.0
        %766 = vmatprep.subr.mxu0 0.0
        %767 = vmatpush1.msra.mxu0 0.0
        %768 = vmatprep.subr.mxu0 0.0
        %769 = vmatpush1.msra.mxu0 0.0
        %770 = vmatprep.subr.mxu0 0.0
        %771 = vmatpush1.msra.mxu0 0.0
        %772 = vmatprep.subr.mxu0 0.0
        %773 = vmatpush1.msra.mxu0 0.0
        %774 = vmatprep.subr.mxu0 0.0
        %775 = vmatpush1.msra.mxu0 0.0
        %776 = vmatprep.subr.mxu0 0.0
        %777 = vmatpush1.msra.mxu0 0.0
        %778 = vmatprep.subr.mxu0 0.0
        %779 = vmatpush1.msra.mxu0 0.0
        %780 = vmatprep.subr.mxu0 0.0
        %781 = vmatpush1.msra.mxu0 0.0
        %782 = vmatprep.subr.mxu0 0.0
        %783 = vmatpush1.msra.mxu0 0.0
        %784 = vmatprep.subr.mxu0 0.0
        %785 = vmatpush1.msra.mxu0 0.0
        %786 = vmatprep.subr.mxu0 0.0
        %787 = vmatpush1.msra.mxu0 0.0
        %788 = vmatprep.subr.mxu0 0.0
        %789 = vmatpush1.msra.mxu0 0.0
        %790 = vmatprep.subr.mxu0 0.0
        %791 = vmatpush1.msra.mxu0 0.0
        %792 = vmatprep.subr.mxu0 %v760
        %793 = vmatpush1.msra.mxu0 %v757
        %794 = vmatprep.subr.mxu0 0.0
        %795 = vmatpush2.msra.mxu0 0.0
        %796 = vmatprep.subr.mxu0 0.0
        %797 = vmatpush2.msra.mxu0 0.0
        %798 = vmatprep.subr.mxu0 0.0
        %799 = vmatpush2.msra.mxu0 0.0
        %800 = vmatprep.subr.mxu0 0.0
        %801 = vmatpush2.msra.mxu0 0.0
        %802 = vmatprep.subr.mxu0 0.0
        %803 = vmatpush2.msra.mxu0 0.0
        %804 = vmatprep.subr.mxu0 0.0
        %805 = vmatpush2.msra.mxu0 0.0
        %806 = vmatprep.subr.mxu0 0.0
        %807 = vmatpush2.msra.mxu0 0.0
        %808 = vmatprep.subr.mxu0 0.0
        %809 = vmatpush2.msra.mxu0 0.0
        %810 = vmatprep.subr.mxu0 0.0
        %811 = vmatpush2.msra.mxu0 0.0
        %812 = vmatprep.subr.mxu0 0.0
        %813 = vmatpush2.msra.mxu0 0.0
        %814 = vmatprep.subr.mxu0 0.0
        %815 = vmatpush2.msra.mxu0 0.0
        %816 = vmatprep.subr.mxu0 0.0
        %817 = vmatpush2.msra.mxu0 0.0
        %818 = vmatprep.subr.mxu0 0.0
        %819 = vmatpush2.msra.mxu0 0.0
        %820 = vmatprep.subr.mxu0 0.0
        %821 = vmatpush2.msra.mxu0 0.0
        %822 = vmatprep.subr.mxu0 0.0
        %823 = vmatpush2.msra.mxu0 0.0
        %824 = vmatprep.subr.mxu0 0.0
        %825 = vmatpush2.msra.mxu0 0.0
        %826 = vmatprep.mubr.f32.mxu0 0.0
        %827 = vmatmul.mubr.f32.gmra.mxu0 %v661
        %v828 = vpop.f32.mrf.mxu0
        %v829 = vadd.f32 0.0, %v828
        %v830 = vpop.f32.mrf.mxu0
        %v831 = vadd.f32 0.0, %v830
        %832 = vmatprep.mubr.f32.mxu0 0.0
        %833 = vmatmul.mubr.f32.gmra.mxu0 %v664
        %v834 = vpop.f32.mrf.mxu0
        %v835 = vadd.f32 0.0, %v834
        %v836 = vpop.f32.mrf.mxu0
        %v837 = vadd.f32 0.0, %v836
        %838 = vmatprep.mubr.f32.mxu0 0.0
        %839 = vmatmul.mubr.f32.gmra.mxu0 %v667
        %v840 = vpop.f32.mrf.mxu0
        %v841 = vadd.f32 0.0, %v840
        %v842 = vpop.f32.mrf.mxu0
        %v843 = vadd.f32 0.0, %v842
        %844 = vmatprep.mubr.f32.mxu0 0.0
        %845 = vmatmul.mubr.f32.gmra.mxu0 %v670
        %v846 = vpop.f32.mrf.mxu0
        %v847 = vadd.f32 0.0, %v846
        %v848 = vpop.f32.mrf.mxu0
        %v849 = vadd.f32 0.0, %v848
        %850 = vmatprep.mubr.f32.mxu0 0.0
        %851 = vmatmul.mubr.f32.gmra.mxu0 %v673
        %v852 = vpop.f32.mrf.mxu0
        %v853 = vadd.f32 0.0, %v852
        %v854 = vpop.f32.mrf.mxu0
        %v855 = vadd.f32 0.0, %v854
        %856 = vmatprep.mubr.f32.mxu0 0.0
        %857 = vmatmul.mubr.f32.gmra.mxu0 %v676
        %v858 = vpop.f32.mrf.mxu0
        %v859 = vadd.f32 0.0, %v858
        %v860 = vpop.f32.mrf.mxu0
        %v861 = vadd.f32 0.0, %v860
        %862 = vmatprep.mubr.f32.mxu0 0.0
        %863 = vmatmul.mubr.f32.gmra.mxu0 %v679
        %v864 = vpop.f32.mrf.mxu0
        %v865 = vadd.f32 0.0, %v864
        %v866 = vpop.f32.mrf.mxu0
        %v867 = vadd.f32 0.0, %v866
        %868 = vmatprep.mubr.f32.mxu0 0.0
        %869 = vmatmul.mubr.f32.gmra.mxu0 %v682
        %v870 = vpop.f32.mrf.mxu0
        %v871 = vadd.f32 0.0, %v870
        %v872 = vpop.f32.mrf.mxu0
        %v873 = vadd.f32 0.0, %v872
        %874 = vmatprep.mubr.f32.mxu0 0.0
        %875 = vmatmul.mubr.f32.gmra.mxu0 %v685
        %v876 = vpop.f32.mrf.mxu0
        %v877 = vadd.f32 0.0, %v876
        %v878 = vpop.f32.mrf.mxu0
        %v879 = vadd.f32 0.0, %v878
        %880 = vmatprep.mubr.f32.mxu0 0.0
        %881 = vmatmul.mubr.f32.gmra.mxu0 %v688
        %v882 = vpop.f32.mrf.mxu0
        %v883 = vadd.f32 0.0, %v882
        %v884 = vpop.f32.mrf.mxu0
        %v885 = vadd.f32 0.0, %v884
        %886 = vmatprep.mubr.f32.mxu0 0.0
        %887 = vmatmul.mubr.f32.gmra.mxu0 %v691
        %v888 = vpop.f32.mrf.mxu0
        %v889 = vadd.f32 0.0, %v888
        %v890 = vpop.f32.mrf.mxu0
        %v891 = vadd.f32 0.0, %v890
        %892 = vmatprep.mubr.f32.mxu0 0.0
        %893 = vmatmul.mubr.f32.gmra.mxu0 %v694
        %v894 = vpop.f32.mrf.mxu0
        %v895 = vadd.f32 0.0, %v894
        %v896 = vpop.f32.mrf.mxu0
        %v897 = vadd.f32 0.0, %v896
        %898 = vmatprep.mubr.f32.mxu0 0.0
        %899 = vmatmul.mubr.f32.gmra.mxu0 %v697
        %v900 = vpop.f32.mrf.mxu0
        %v901 = vadd.f32 0.0, %v900
        %v902 = vpop.f32.mrf.mxu0
        %v903 = vadd.f32 0.0, %v902
        %904 = vmatprep.mubr.f32.mxu0 0.0
        %905 = vmatmul.mubr.f32.gmra.mxu0 %v700
        %v906 = vpop.f32.mrf.mxu0
        %v907 = vadd.f32 0.0, %v906
        %v908 = vpop.f32.mrf.mxu0
        %v909 = vadd.f32 0.0, %v908
        %910 = vmatprep.mubr.f32.mxu0 0.0
        %911 = vmatmul.mubr.f32.gmra.mxu0 %v703
        %v912 = vpop.f32.mrf.mxu0
        %v913 = vadd.f32 0.0, %v912
        %v914 = vpop.f32.mrf.mxu0
        %v915 = vadd.f32 0.0, %v914
        %916 = vmatprep.mubr.f32.mxu0 0.0
        %917 = vmatmul.mubr.f32.gmra.mxu0 %v706
        %v918 = vpop.f32.mrf.mxu0
        %v919 = vadd.f32 0.0, %v918
        %v920 = vpop.f32.mrf.mxu0
        %v921 = vadd.f32 0.0, %v920
        %922 = vmatprep.mubr.f32.mxu0 0.0
        %923 = vmatmul.mubr.f32.gmra.mxu0 %v709
        %v924 = vpop.f32.mrf.mxu0
        %v925 = vadd.f32 0.0, %v924
        %v926 = vpop.f32.mrf.mxu0
        %v927 = vadd.f32 0.0, %v926
        %928 = vmatprep.mubr.f32.mxu0 0.0
        %929 = vmatmul.mubr.f32.gmra.mxu0 %v712
        %v930 = vpop.f32.mrf.mxu0
        %v931 = vadd.f32 0.0, %v930
        %v932 = vpop.f32.mrf.mxu0
        %v933 = vadd.f32 0.0, %v932
        %934 = vmatprep.mubr.f32.mxu0 0.0
        %935 = vmatmul.mubr.f32.gmra.mxu0 %v715
        %v936 = vpop.f32.mrf.mxu0
        %v937 = vadd.f32 0.0, %v936
        %v938 = vpop.f32.mrf.mxu0
        %v939 = vadd.f32 0.0, %v938
        %940 = vmatprep.mubr.f32.mxu0 0.0
        %941 = vmatmul.mubr.f32.gmra.mxu0 %v718
        %v942 = vpop.f32.mrf.mxu0
        %v943 = vadd.f32 0.0, %v942
        %v944 = vpop.f32.mrf.mxu0
        %v945 = vadd.f32 0.0, %v944
        %946 = vmatprep.mubr.f32.mxu0 0.0
        %947 = vmatmul.mubr.f32.gmra.mxu0 %v721
        %v948 = vpop.f32.mrf.mxu0
        %v949 = vadd.f32 0.0, %v948
        %v950 = vpop.f32.mrf.mxu0
        %v951 = vadd.f32 0.0, %v950
        %952 = vmatprep.mubr.f32.mxu0 0.0
        %953 = vmatmul.mubr.f32.gmra.mxu0 %v724
        %v954 = vpop.f32.mrf.mxu0
        %v955 = vadd.f32 0.0, %v954
        %v956 = vpop.f32.mrf.mxu0
        %v957 = vadd.f32 0.0, %v956
        %958 = vmatprep.mubr.f32.mxu0 0.0
        %959 = vmatmul.mubr.f32.gmra.mxu0 %v727
        %v960 = vpop.f32.mrf.mxu0
        %v961 = vadd.f32 0.0, %v960
        %v962 = vpop.f32.mrf.mxu0
        %v963 = vadd.f32 0.0, %v962
        %964 = vmatprep.mubr.f32.mxu0 0.0
        %965 = vmatmul.mubr.f32.gmra.mxu0 %v730
        %v966 = vpop.f32.mrf.mxu0
        %v967 = vadd.f32 0.0, %v966
        %v968 = vpop.f32.mrf.mxu0
        %v969 = vadd.f32 0.0, %v968
        %970 = vmatprep.mubr.f32.mxu0 0.0
        %971 = vmatmul.mubr.f32.gmra.mxu0 %v733
        %v972 = vpop.f32.mrf.mxu0
        %v973 = vadd.f32 0.0, %v972
        %v974 = vpop.f32.mrf.mxu0
        %v975 = vadd.f32 0.0, %v974
        %976 = vmatprep.mubr.f32.mxu0 0.0
        %977 = vmatmul.mubr.f32.gmra.mxu0 %v736
        %v978 = vpop.f32.mrf.mxu0
        %v979 = vadd.f32 0.0, %v978
        %v980 = vpop.f32.mrf.mxu0
        %v981 = vadd.f32 0.0, %v980
        %982 = vmatprep.mubr.f32.mxu0 0.0
        %983 = vmatmul.mubr.f32.gmra.mxu0 %v739
        %v984 = vpop.f32.mrf.mxu0
        %v985 = vadd.f32 0.0, %v984
        %v986 = vpop.f32.mrf.mxu0
        %v987 = vadd.f32 0.0, %v986
        %988 = vmatprep.mubr.f32.mxu0 0.0
        %989 = vmatmul.mubr.f32.gmra.mxu0 %v742
        %v990 = vpop.f32.mrf.mxu0
        %v991 = vadd.f32 0.0, %v990
        %v992 = vpop.f32.mrf.mxu0
        %v993 = vadd.f32 0.0, %v992
        %994 = vmatprep.mubr.f32.mxu0 0.0
        %995 = vmatmul.mubr.f32.gmra.mxu0 %v745
        %v996 = vpop.f32.mrf.mxu0
        %v997 = vadd.f32 0.0, %v996
        %v998 = vpop.f32.mrf.mxu0
        %v999 = vadd.f32 0.0, %v998
        %1000 = vmatprep.mubr.f32.mxu0 0.0
        %1001 = vmatmul.mubr.f32.gmra.mxu0 %v748
        %v1002 = vpop.f32.mrf.mxu0
        %v1003 = vadd.f32 0.0, %v1002
        %v1004 = vpop.f32.mrf.mxu0
        %v1005 = vadd.f32 0.0, %v1004
        %1006 = vmatprep.mubr.f32.mxu0 0.0
        %1007 = vmatmul.mubr.f32.gmra.mxu0 %v751
        %v1008 = vpop.f32.mrf.mxu0
        %v1009 = vadd.f32 0.0, %v1008
        %v1010 = vpop.f32.mrf.mxu0
        %v1011 = vadd.f32 0.0, %v1010
        %1012 = vmatprep.mubr.f32.mxu0 0.0
        %1013 = vmatmul.mubr.f32.gmra.mxu0 %v754
        %v1014 = vpop.f32.mrf.mxu0
        %v1015 = vadd.f32 0.0, %v1014
        %v1016 = vpop.f32.mrf.mxu0
        %v1017 = vadd.f32 0.0, %v1016
        %1018 = vdwg.mxu0
        %v1019 = vmax.f32 %v829, %v841
        %v1020 = vmax.f32 %v835, %v847
        %v1021 = vmax.f32 %v1019, %v853
        %v1022 = vmax.f32 %v1020, %v859
        %v1023 = vmax.f32 %v1021, %v865
        %v1024 = vmax.f32 %v1022, %v871
        %v1025 = vmax.f32 %v1023, %v877
        %v1026 = vmax.f32 %v1024, %v883
        %v1027 = vmax.f32 %v1025, %v889
        %v1028 = vmax.f32 %v1026, %v895
        %v1029 = vmax.f32 %v1027, %v901
        %v1030 = vmax.f32 %v1028, %v907
        %v1031 = vmax.f32 %v1029, %v913
        %v1032 = vmax.f32 %v1030, %v919
        %v1033 = vmax.f32 %v1031, %v925
        %v1034 = vmax.f32 %v1032, %v931
        %v1035 = vmax.f32 %v1033, %v937
        %v1036 = vmax.f32 %v1034, %v943
        %v1037 = vmax.f32 %v1035, %v949
        %v1038 = vmax.f32 %v1036, %v955
        %v1039 = vmax.f32 %v1037, %v961
        %v1040 = vmax.f32 %v1038, %v967
        %v1041 = vmax.f32 %v1039, %v973
        %v1042 = vmax.f32 %v1040, %v979
        %v1043 = vmax.f32 %v1041, %v985
        %v1044 = vmax.f32 %v1042, %v991
        %v1045 = vmax.f32 %v1043, %v997
        %v1046 = vmax.f32 %v1044, %v1003
        %v1047 = vmax.f32 %v1045, %v1009
        %v1048 = vmax.f32 %v1046, %v1015
        %v1049 = vmax.f32 %v1047, %v1048
        %v1050 = vrot.slane %v1049, 4
        %v1051 = vmax.f32 %v1049, %v1050
        %v1052 = vrot.slane %v1051, 2
        %v1053 = vmax.f32 %v1051, %v1052
        %v1054 = vrot.slane %v1053, 1
        %v1055 = vmax.f32 %v1053, %v1054
        %v1056 = vmax.f32 %v831, %v843
        %v1057 = vmax.f32 %v837, %v849
        %v1058 = vmax.f32 %v1056, %v855
        %v1059 = vmax.f32 %v1057, %v861
        %v1060 = vmax.f32 %v1058, %v867
        %v1061 = vmax.f32 %v1059, %v873
        %v1062 = vmax.f32 %v1060, %v879
        %v1063 = vmax.f32 %v1061, %v885
        %v1064 = vmax.f32 %v1062, %v891
        %v1065 = vmax.f32 %v1063, %v897
        %v1066 = vmax.f32 %v1064, %v903
        %v1067 = vmax.f32 %v1065, %v909
        %v1068 = vmax.f32 %v1066, %v915
        %v1069 = vmax.f32 %v1067, %v921
        %v1070 = vmax.f32 %v1068, %v927
        %v1071 = vmax.f32 %v1069, %v933
        %v1072 = vmax.f32 %v1070, %v939
        %v1073 = vmax.f32 %v1071, %v945
        %v1074 = vmax.f32 %v1072, %v951
        %v1075 = vmax.f32 %v1073, %v957
        %v1076 = vmax.f32 %v1074, %v963
        %v1077 = vmax.f32 %v1075, %v969
        %v1078 = vmax.f32 %v1076, %v975
        %v1079 = vmax.f32 %v1077, %v981
        %v1080 = vmax.f32 %v1078, %v987
        %v1081 = vmax.f32 %v1079, %v993
        %v1082 = vmax.f32 %v1080, %v999
        %v1083 = vmax.f32 %v1081, %v1005
        %v1084 = vmax.f32 %v1082, %v1011
        %v1085 = vmax.f32 %v1083, %v1017
        %v1086 = vmax.f32 %v1084, %v1085
        %v1087 = vrot.slane %v1086, 4
        %v1088 = vmax.f32 %v1086, %v1087
        %v1089 = vrot.slane %v1088, 2
        %v1090 = vmax.f32 %v1088, %v1089
        %v1091 = vrot.slane %v1090, 1
        %v1092 = vmax.f32 %v1090, %v1091
        %v1093 = vsub.f32 %v829, %v1055
        %v1094 = vsub.f32 %v831, %v1092
        %v1095 = vsub.f32 %v835, %v1055
        %v1096 = vsub.f32 %v837, %v1092
        %v1097 = vsub.f32 %v841, %v1055
        %v1098 = vsub.f32 %v843, %v1092
        %v1099 = vsub.f32 %v847, %v1055
        %v1100 = vsub.f32 %v849, %v1092
        %v1101 = vsub.f32 %v853, %v1055
        %v1102 = vsub.f32 %v855, %v1092
        %v1103 = vsub.f32 %v859, %v1055
        %v1104 = vsub.f32 %v861, %v1092
        %v1105 = vsub.f32 %v865, %v1055
        %v1106 = vsub.f32 %v867, %v1092
        %v1107 = vsub.f32 %v871, %v1055
        %v1108 = vsub.f32 %v873, %v1092
        %v1109 = vsub.f32 %v877, %v1055
        %v1110 = vsub.f32 %v879, %v1092
        %v1111 = vsub.f32 %v883, %v1055
        %v1112 = vsub.f32 %v885, %v1092
        %v1113 = vsub.f32 %v889, %v1055
        %v1114 = vsub.f32 %v891, %v1092
        %v1115 = vsub.f32 %v895, %v1055
        %v1116 = vsub.f32 %v897, %v1092
        %v1117 = vsub.f32 %v901, %v1055
        %v1118 = vsub.f32 %v903, %v1092
        %v1119 = vsub.f32 %v907, %v1055
        %v1120 = vsub.f32 %v909, %v1092
        %v1121 = vsub.f32 %v913, %v1055
        %v1122 = vsub.f32 %v915, %v1092
        %v1123 = vsub.f32 %v919, %v1055
        %v1124 = vsub.f32 %v921, %v1092
        %v1125 = vsub.f32 %v925, %v1055
        %v1126 = vsub.f32 %v927, %v1092
        %v1127 = vsub.f32 %v931, %v1055
        %v1128 = vsub.f32 %v933, %v1092
        %v1129 = vsub.f32 %v937, %v1055
        %v1130 = vsub.f32 %v939, %v1092
        %v1131 = vsub.f32 %v943, %v1055
        %v1132 = vsub.f32 %v945, %v1092
        %v1133 = vsub.f32 %v949, %v1055
        %v1134 = vsub.f32 %v951, %v1092
        %v1135 = vsub.f32 %v955, %v1055
        %v1136 = vsub.f32 %v957, %v1092
        %v1137 = vsub.f32 %v961, %v1055
        %v1138 = vsub.f32 %v963, %v1092
        %v1139 = vsub.f32 %v967, %v1055
        %v1140 = vsub.f32 %v969, %v1092
        %v1141 = vsub.f32 %v973, %v1055
        %v1142 = vsub.f32 %v975, %v1092
        %v1143 = vsub.f32 %v979, %v1055
        %v1144 = vsub.f32 %v981, %v1092
        %v1145 = vsub.f32 %v985, %v1055
        %v1146 = vsub.f32 %v987, %v1092
        %v1147 = vsub.f32 %v991, %v1055
        %v1148 = vsub.f32 %v993, %v1092
        %v1149 = vsub.f32 %v997, %v1055
        %v1150 = vsub.f32 %v999, %v1092
        %v1151 = vsub.f32 %v1003, %v1055
        %v1152 = vsub.f32 %v1005, %v1092
        %v1153 = vsub.f32 %v1009, %v1055
        %v1154 = vsub.f32 %v1011, %v1092
        %v1155 = vsub.f32 %v1015, %v1055
        %v1156 = vsub.f32 %v1017, %v1092
        %v1157 = vmul.f32 %v1093, 1.442695
        %v1158 = vpow.pop %v1157
        %v1159 = vmul.f32 %v1094, 1.442695
        %v1160 = vpow.pop %v1159
        %v1161 = vmul.f32 %v1095, 1.442695
        %v1162 = vpow.pop %v1161
        %v1163 = vmul.f32 %v1096, 1.442695
        %v1164 = vpow.pop %v1163
        %v1165 = vmul.f32 %v1097, 1.442695
        %v1166 = vpow.pop %v1165
        %v1167 = vmul.f32 %v1098, 1.442695
        %v1168 = vpow.pop %v1167
        %v1169 = vmul.f32 %v1099, 1.442695
        %v1170 = vpow.pop %v1169
        %v1171 = vmul.f32 %v1100, 1.442695
        %v1172 = vpow.pop %v1171
        %v1173 = vmul.f32 %v1101, 1.442695
        %v1174 = vpow.pop %v1173
        %v1175 = vmul.f32 %v1102, 1.442695
        %v1176 = vpow.pop %v1175
        %v1177 = vmul.f32 %v1103, 1.442695
        %v1178 = vpow.pop %v1177
        %v1179 = vmul.f32 %v1104, 1.442695
        %v1180 = vpow.pop %v1179
        %v1181 = vmul.f32 %v1105, 1.442695
        %v1182 = vpow.pop %v1181
        %v1183 = vmul.f32 %v1106, 1.442695
        %v1184 = vpow.pop %v1183
        %v1185 = vmul.f32 %v1107, 1.442695
        %v1186 = vpow.pop %v1185
        %v1187 = vmul.f32 %v1108, 1.442695
        %v1188 = vpow.pop %v1187
        %v1189 = vmul.f32 %v1109, 1.442695
        %v1190 = vpow.pop %v1189
        %v1191 = vmul.f32 %v1110, 1.442695
        %v1192 = vpow.pop %v1191
        %v1193 = vmul.f32 %v1111, 1.442695
        %v1194 = vpow.pop %v1193
        %v1195 = vmul.f32 %v1112, 1.442695
        %v1196 = vpow.pop %v1195
        %v1197 = vmul.f32 %v1113, 1.442695
        %v1198 = vpow.pop %v1197
        %v1199 = vmul.f32 %v1114, 1.442695
        %v1200 = vpow.pop %v1199
        %v1201 = vmul.f32 %v1115, 1.442695
        %v1202 = vpow.pop %v1201
        %v1203 = vmul.f32 %v1116, 1.442695
        %v1204 = vpow.pop %v1203
        %v1205 = vmul.f32 %v1117, 1.442695
        %v1206 = vpow.pop %v1205
        %v1207 = vmul.f32 %v1118, 1.442695
        %v1208 = vpow.pop %v1207
        %v1209 = vmul.f32 %v1119, 1.442695
        %v1210 = vpow.pop %v1209
        %v1211 = vmul.f32 %v1120, 1.442695
        %v1212 = vpow.pop %v1211
        %v1213 = vmul.f32 %v1121, 1.442695
        %v1214 = vpow.pop %v1213
        %v1215 = vmul.f32 %v1122, 1.442695
        %v1216 = vpow.pop %v1215
        %v1217 = vmul.f32 %v1123, 1.442695
        %v1218 = vpow.pop %v1217
        %v1219 = vmul.f32 %v1124, 1.442695
        %v1220 = vpow.pop %v1219
        %v1221 = vmul.f32 %v1125, 1.442695
        %v1222 = vpow.pop %v1221
        %v1223 = vmul.f32 %v1126, 1.442695
        %v1224 = vpow.pop %v1223
        %v1225 = vmul.f32 %v1127, 1.442695
        %v1226 = vpow.pop %v1225
        %v1227 = vmul.f32 %v1128, 1.442695
        %v1228 = vpow.pop %v1227
        %v1229 = vmul.f32 %v1129, 1.442695
        %v1230 = vpow.pop %v1229
        %v1231 = vmul.f32 %v1130, 1.442695
        %v1232 = vpow.pop %v1231
        %v1233 = vmul.f32 %v1131, 1.442695
        %v1234 = vpow.pop %v1233
        %v1235 = vmul.f32 %v1132, 1.442695
        %v1236 = vpow.pop %v1235
        %v1237 = vmul.f32 %v1133, 1.442695
        %v1238 = vpow.pop %v1237
        %v1239 = vmul.f32 %v1134, 1.442695
        %v1240 = vpow.pop %v1239
        %v1241 = vmul.f32 %v1135, 1.442695
        %v1242 = vpow.pop %v1241
        %v1243 = vmul.f32 %v1136, 1.442695
        %v1244 = vpow.pop %v1243
        %v1245 = vmul.f32 %v1137, 1.442695
        %v1246 = vpow.pop %v1245
        %v1247 = vmul.f32 %v1138, 1.442695
        %v1248 = vpow.pop %v1247
        %v1249 = vmul.f32 %v1139, 1.442695
        %v1250 = vpow.pop %v1249
        %v1251 = vmul.f32 %v1140, 1.442695
        %v1252 = vpow.pop %v1251
        %v1253 = vmul.f32 %v1141, 1.442695
        %v1254 = vpow.pop %v1253
        %v1255 = vmul.f32 %v1142, 1.442695
        %v1256 = vpow.pop %v1255
        %v1257 = vmul.f32 %v1143, 1.442695
        %v1258 = vpow.pop %v1257
        %v1259 = vmul.f32 %v1144, 1.442695
        %v1260 = vpow.pop %v1259
        %v1261 = vmul.f32 %v1145, 1.442695
        %v1262 = vpow.pop %v1261
        %v1263 = vmul.f32 %v1146, 1.442695
        %v1264 = vpow.pop %v1263
        %v1265 = vmul.f32 %v1147, 1.442695
        %v1266 = vpow.pop %v1265
        %v1267 = vmul.f32 %v1148, 1.442695
        %v1268 = vpow.pop %v1267
        %v1269 = vmul.f32 %v1149, 1.442695
        %v1270 = vpow.pop %v1269
        %v1271 = vmul.f32 %v1150, 1.442695
        %v1272 = vpow.pop %v1271
        %v1273 = vmul.f32 %v1151, 1.442695
        %v1274 = vpow.pop %v1273
        %v1275 = vmul.f32 %v1152, 1.442695
        %v1276 = vpow.pop %v1275
        %v1277 = vmul.f32 %v1153, 1.442695
        %v1278 = vpow.pop %v1277
        %v1279 = vmul.f32 %v1154, 1.442695
        %v1280 = vpow.pop %v1279
        %v1281 = vmul.f32 %v1155, 1.442695
        %v1282 = vpow.pop %v1281
        %v1283 = vmul.f32 %v1156, 1.442695
        %v1284 = vpow.pop %v1283
        %v1285 = vadd.f32 %v1158, %v1162
        %v1286 = vadd.f32 %v1285, %v1166
        %v1287 = vadd.f32 %v1286, %v1170
        %v1288 = vadd.f32 %v1287, %v1174
        %v1289 = vadd.f32 %v1288, %v1178
        %v1290 = vadd.f32 %v1289, %v1182
        %v1291 = vadd.f32 %v1290, %v1186
        %v1292 = vadd.f32 %v1291, %v1190
        %v1293 = vadd.f32 %v1292, %v1194
        %v1294 = vadd.f32 %v1293, %v1198
        %v1295 = vadd.f32 %v1294, %v1202
        %v1296 = vadd.f32 %v1295, %v1206
        %v1297 = vadd.f32 %v1296, %v1210
        %v1298 = vadd.f32 %v1297, %v1214
        %v1299 = vadd.f32 %v1298, %v1218
        %v1300 = vadd.f32 %v1299, %v1222
        %v1301 = vadd.f32 %v1300, %v1226
        %v1302 = vadd.f32 %v1301, %v1230
        %v1303 = vadd.f32 %v1302, %v1234
        %v1304 = vadd.f32 %v1303, %v1238
        %v1305 = vadd.f32 %v1304, %v1242
        %v1306 = vadd.f32 %v1305, %v1246
        %v1307 = vadd.f32 %v1306, %v1250
        %v1308 = vadd.f32 %v1307, %v1254
        %v1309 = vadd.f32 %v1308, %v1258
        %v1310 = vadd.f32 %v1309, %v1262
        %v1311 = vadd.f32 %v1310, %v1266
        %v1312 = vadd.f32 %v1311, %v1270
        %v1313 = vadd.f32 %v1312, %v1274
        %v1314 = vadd.f32 %v1313, %v1278
        %v1315 = vadd.f32 %v1314, %v1282
        %v1316 = vrot.slane %v1315, 4
        %v1317 = vadd.f32 %v1315, %v1316
        %v1318 = vrot.slane %v1317, 2
        %v1319 = vadd.f32 %v1317, %v1318
        %v1320 = vrot.slane %v1319, 1
        %v1321 = vadd.f32 %v1319, %v1320
        %v1322 = vadd.f32 %v1160, %v1164
        %v1323 = vadd.f32 %v1322, %v1168
        %v1324 = vadd.f32 %v1323, %v1172
        %v1325 = vadd.f32 %v1324, %v1176
        %v1326 = vadd.f32 %v1325, %v1180
        %v1327 = vadd.f32 %v1326, %v1184
        %v1328 = vadd.f32 %v1327, %v1188
        %v1329 = vadd.f32 %v1328, %v1192
        %v1330 = vadd.f32 %v1329, %v1196
        %v1331 = vadd.f32 %v1330, %v1200
        %v1332 = vadd.f32 %v1331, %v1204
        %v1333 = vadd.f32 %v1332, %v1208
        %v1334 = vadd.f32 %v1333, %v1212
        %v1335 = vadd.f32 %v1334, %v1216
        %v1336 = vadd.f32 %v1335, %v1220
        %v1337 = vadd.f32 %v1336, %v1224
        %v1338 = vadd.f32 %v1337, %v1228
        %v1339 = vadd.f32 %v1338, %v1232
        %v1340 = vadd.f32 %v1339, %v1236
        %v1341 = vadd.f32 %v1340, %v1240
        %v1342 = vadd.f32 %v1341, %v1244
        %v1343 = vadd.f32 %v1342, %v1248
        %v1344 = vadd.f32 %v1343, %v1252
        %v1345 = vadd.f32 %v1344, %v1256
        %v1346 = vadd.f32 %v1345, %v1260
        %v1347 = vadd.f32 %v1346, %v1264
        %v1348 = vadd.f32 %v1347, %v1268
        %v1349 = vadd.f32 %v1348, %v1272
        %v1350 = vadd.f32 %v1349, %v1276
        %v1351 = vadd.f32 %v1350, %v1280
        %v1352 = vadd.f32 %v1351, %v1284
        %v1353 = vrot.slane %v1352, 4
        %v1354 = vadd.f32 %v1352, %v1353
        %v1355 = vrot.slane %v1354, 2
        %v1356 = vadd.f32 %v1354, %v1355
        %v1357 = vrot.slane %v1356, 1
        %v1358 = vadd.f32 %v1356, %v1357
        %v1359 = vrcp.pop %v1321
        %v1360 = vrcp.pop %v1358
        %v1361 = vpack.c.bf16 %v1162, %v1158
        %v1362 = vpack.c.bf16 %v1164, %v1160
        %v1363 = vpack.c.bf16 %v1170, %v1166
        %v1364 = vpack.c.bf16 %v1172, %v1168
        %v1365 = vpack.c.bf16 %v1178, %v1174
        %v1366 = vpack.c.bf16 %v1180, %v1176
        %v1367 = vpack.c.bf16 %v1186, %v1182
        %v1368 = vpack.c.bf16 %v1188, %v1184
        %v1369 = vpack.c.bf16 %v1194, %v1190
        %v1370 = vpack.c.bf16 %v1196, %v1192
        %v1371 = vpack.c.bf16 %v1202, %v1198
        %v1372 = vpack.c.bf16 %v1204, %v1200
        %v1373 = vpack.c.bf16 %v1210, %v1206
        %v1374 = vpack.c.bf16 %v1212, %v1208
        %v1375 = vpack.c.bf16 %v1218, %v1214
        %v1376 = vpack.c.bf16 %v1220, %v1216
        %v1377 = vpack.c.bf16 %v1226, %v1222
        %v1378 = vpack.c.bf16 %v1228, %v1224
        %v1379 = vpack.c.bf16 %v1234, %v1230
        %v1380 = vpack.c.bf16 %v1236, %v1232
        %v1381 = vpack.c.bf16 %v1242, %v1238
        %v1382 = vpack.c.bf16 %v1244, %v1240
        %v1383 = vpack.c.bf16 %v1250, %v1246
        %v1384 = vpack.c.bf16 %v1252, %v1248
        %v1385 = vpack.c.bf16 %v1258, %v1254
        %v1386 = vpack.c.bf16 %v1260, %v1256
        %v1387 = vpack.c.bf16 %v1266, %v1262
        %v1388 = vpack.c.bf16 %v1268, %v1264
        %v1389 = vpack.c.bf16 %v1274, %v1270
        %v1390 = vpack.c.bf16 %v1276, %v1272
        %v1391 = vpack.c.bf16 %v1282, %v1278
        %v1392 = vpack.c.bf16 %v1284, %v1280
        %v1393 = vmul.f32 %v592, %v1359
        %v1394 = vmul.f32 %v594, %v1360
        %v1395 = vpack.c.bf16 %v1393, %v1393
        %v1396 = vpack.c.bf16 %v1394, %v1394
        %1397 = vmatprep.subr.bf16.mxu0 %v1376
        %1398 = vmatpush1.bf16.xpose.msra.mxu0 %v1375
        %1399 = vmatprep.subr.bf16.mxu0 %v1374
        %1400 = vmatpush1.bf16.xpose.msra.mxu0 %v1373
        %1401 = vmatprep.subr.bf16.mxu0 %v1372
        %1402 = vmatpush1.bf16.xpose.msra.mxu0 %v1371
        %1403 = vmatprep.subr.bf16.mxu0 %v1370
        %1404 = vmatpush1.bf16.xpose.msra.mxu0 %v1369
        %1405 = vmatprep.subr.bf16.mxu0 %v1368
        %1406 = vmatpush1.bf16.xpose.msra.mxu0 %v1367
        %1407 = vmatprep.subr.bf16.mxu0 %v1366
        %1408 = vmatpush1.bf16.xpose.msra.mxu0 %v1365
        %1409 = vmatprep.subr.bf16.mxu0 %v1364
        %1410 = vmatpush1.bf16.xpose.msra.mxu0 %v1363
        %1411 = vmatprep.subr.bf16.mxu0 %v1362
        %1412 = vmatpush1.bf16.xpose.msra.mxu0 %v1361
        %1413 = vmatprep.subr.bf16.mxu0 %v1392
        %1414 = vmatpush2.bf16.xpose.msra.mxu0 %v1391
        %1415 = vmatprep.subr.bf16.mxu0 %v1390
        %1416 = vmatpush2.bf16.xpose.msra.mxu0 %v1389
        %1417 = vmatprep.subr.bf16.mxu0 %v1388
        %1418 = vmatpush2.bf16.xpose.msra.mxu0 %v1387
        %1419 = vmatprep.subr.bf16.mxu0 %v1386
        %1420 = vmatpush2.bf16.xpose.msra.mxu0 %v1385
        %1421 = vmatprep.subr.bf16.mxu0 %v1384
        %1422 = vmatpush2.bf16.xpose.msra.mxu0 %v1383
        %1423 = vmatprep.subr.bf16.mxu0 %v1382
        %1424 = vmatpush2.bf16.xpose.msra.mxu0 %v1381
        %1425 = vmatprep.subr.bf16.mxu0 %v1380
        %1426 = vmatpush2.bf16.xpose.msra.mxu0 %v1379
        %1427 = vmatprep.subr.bf16.mxu0 %v1378
        %1428 = vmatpush2.bf16.xpose.msra.mxu0 %v1377
        %1429 = vmatprep.mubr.bf16.mxu0 %v1396
        %1430 = vmatmul.mubr.bf16.gmra.mxu0 %v1395
        %v1431 = vpop.f32.mrf.mxu0
        %v1432 = vadd.f32 0.0, %v1431
        %v1433 = vpop.f32.mrf.mxu0
        %v1434 = vadd.f32 0.0, %v1433
        %v1435 = vpop.f32.mrf.mxu0
        %v1436 = vpop.f32.mrf.mxu0
        %1437 = vdwg.mxu0
        %v1438 = vld [vmem:[%s7] sm:$0xf]
        %v1439 = vld [vmem:[%s8] sm:$0xf]
        %1441 = vset.pattern.permute.xlu0 0
        %1442 = vperm.xlu0 %1441, %v1439
        %v1443 = vpop.permute.xlu0 %1442
        %v1446 = vsel %vm354, %v1438, 0
        %v1449 = vsel %vm358, %v1432, 0
        %v1452 = vsel %vm358, %v1434, 0
        %1454 = vmatprep.subr.mxu0 0.0
        %1455 = vmatpush1.msra.mxu0 0.0
        %1456 = vmatprep.subr.mxu0 0.0
        %1457 = vmatpush1.msra.mxu0 0.0
        %1458 = vmatprep.subr.mxu0 0.0
        %1459 = vmatpush1.msra.mxu0 0.0
        %1460 = vmatprep.subr.mxu0 0.0
        %1461 = vmatpush1.msra.mxu0 0.0
        %1462 = vmatprep.subr.mxu0 0.0
        %1463 = vmatpush1.msra.mxu0 0.0
        %1464 = vmatprep.subr.mxu0 0.0
        %1465 = vmatpush1.msra.mxu0 0.0
        %1466 = vmatprep.subr.mxu0 0.0
        %1467 = vmatpush1.msra.mxu0 0.0
        %1468 = vmatprep.subr.mxu0 0.0
        %1469 = vmatpush1.msra.mxu0 0.0
        %1470 = vmatprep.subr.mxu0 0.0
        %1471 = vmatpush1.msra.mxu0 0.0
        %1472 = vmatprep.subr.mxu0 0.0
        %1473 = vmatpush1.msra.mxu0 0.0
        %1474 = vmatprep.subr.mxu0 0.0
        %1475 = vmatpush1.msra.mxu0 0.0
        %1476 = vmatprep.subr.mxu0 0.0
        %1477 = vmatpush1.msra.mxu0 0.0
        %1478 = vmatprep.subr.mxu0 0.0
        %1479 = vmatpush1.msra.mxu0 0.0
        %1480 = vmatprep.subr.mxu0 0.0
        %1481 = vmatpush1.msra.mxu0 0.0
        %1482 = vmatprep.subr.mxu0 0.0
        %1483 = vmatpush1.msra.mxu0 0.0
        %1484 = vmatprep.subr.mxu0 %v1452
        %1485 = vmatpush1.msra.mxu0 %v1449
        %1486 = vmatprep.subr.mxu0 0.0
        %1487 = vmatpush2.msra.mxu0 0.0
        %1488 = vmatprep.subr.mxu0 0.0
        %1489 = vmatpush2.msra.mxu0 0.0
        %1490 = vmatprep.subr.mxu0 0.0
        %1491 = vmatpush2.msra.mxu0 0.0
        %1492 = vmatprep.subr.mxu0 0.0
        %1493 = vmatpush2.msra.mxu0 0.0
        %1494 = vmatprep.subr.mxu0 0.0
        %1495 = vmatpush2.msra.mxu0 0.0
        %1496 = vmatprep.subr.mxu0 0.0
        %1497 = vmatpush2.msra.mxu0 0.0
        %1498 = vmatprep.subr.mxu0 0.0
        %1499 = vmatpush2.msra.mxu0 0.0
        %1500 = vmatprep.subr.mxu0 0.0
        %1501 = vmatpush2.msra.mxu0 0.0
        %1502 = vmatprep.subr.mxu0 0.0
        %1503 = vmatpush2.msra.mxu0 0.0
        %1504 = vmatprep.subr.mxu0 0.0
        %1505 = vmatpush2.msra.mxu0 0.0
        %1506 = vmatprep.subr.mxu0 0.0
        %1507 = vmatpush2.msra.mxu0 0.0
        %1508 = vmatprep.subr.mxu0 0.0
        %1509 = vmatpush2.msra.mxu0 0.0
        %1510 = vmatprep.subr.mxu0 0.0
        %1511 = vmatpush2.msra.mxu0 0.0
        %1512 = vmatprep.subr.mxu0 0.0
        %1513 = vmatpush2.msra.mxu0 0.0
        %1514 = vmatprep.subr.mxu0 0.0
        %1515 = vmatpush2.msra.mxu0 0.0
        %1516 = vmatprep.subr.mxu0 0.0
        %1517 = vmatpush2.msra.mxu0 0.0
        %1518 = vmatprep.mubr.f32.mxu0 0.0
        %1519 = vmatmul.mubr.f32.gmra.mxu0 %v1446
        %v1520 = vpop.f32.mrf.mxu0
        %v1521 = vadd.f32 %v1443, %v1520
        %v1522 = vpop.f32.mrf.mxu0
        %v1523 = vadd.f32 %v1443, %v1522
        %1524 = vdwg.mxu0
        %v1526 = vadd.f32 %v1521, %v344
        %v1527 = vadd.f32 %v1523, %v353
        %v1530 = vcombine.low %v1526, %v1527
        %1532 = vst [vmem:[%s338] sm:$0xff] %v1530
        %s1533 = sand.u32 %s226, 1
        %s1534 = scalar_lea.sflag [#allocation4], %s1533
        %s1535 = sand.u32 %s226, 1
        %s1536 = smul.addr %s1535, 8
        %s1537 = scalar_lea.vmem [#allocation5], %s1536
        // Predicated region
        $region61: #{tpu_custom_call.1} parent=55 // pred_check
          %p1538 = pneg %p236
        $region62: #{tpu_custom_call.1} parent=55 // pred_check_branch
          %1540 = sbr.rel (%p1538) target = $region64
        $region63: #{tpu_custom_call.1} parent=55 // pred_region
          %s1542 = ssub.s32 128, 128
          %1543 = vsyncadd %s1534, %s1542
          %s1544 = smul.addr %s24, 2
          %s1545 = smul.addr %s1544, 64
          %s1546 = scalar_lea.hbm %s9, %s1545
          %s1548 = sshll.u32 %s1537, 4
          %s1549 = int_to_ptr.vmem [resolvable:$true] %s1548
          %1551 = dma.vmem_to_hbm [thread:$0]  %s1549, 128, %s1546, %s1534
        $region64: #{tpu_custom_call.1} parent=55 // pred_fallthru
          _
      $region56: #{tpu_custom_call.1} parent=5 // pred_fallthru
        _
      %p1552 = scmp.le.s32.totalorder 2, %s19
      // Predicated region
      $region65: #{tpu_custom_call.1} parent=5 // pred_check
        %p1553 = pneg %p1552
      $region66: #{tpu_custom_call.1} parent=5 // pred_check_branch
        %1555 = sbr.rel (%p1553) target = $region68
      $region67: #{tpu_custom_call.1} parent=5 // pred_region
        %s1556 = ssub.s32 %s19, 2
        // Predicated region
        $region69: #{tpu_custom_call.1} parent=67 // pred_check
          %p1557 = pneg %p242
        $region70: #{tpu_custom_call.1} parent=67 // pred_check_branch
          %1559 = sbr.rel (%p1557) target = $region72
        $region71: #{tpu_custom_call.1} parent=67 // pred_region
          %s1560 = sand.u32 %s227, 1
          %s1561 = scalar_lea.sflag [#allocation4], %s1560
          %s1562 = sand.u32 %s227, 1
          %s1563 = smul.addr %s1562, 8
          %s1564 = scalar_lea.vmem [#allocation5], %s1563
          %1565 = dma.done %s1561, 128
        $region72: #{tpu_custom_call.1} parent=67 // pred_fallthru
          _
      $region68: #{tpu_custom_call.1} parent=5 // pred_fallthru
        _
    $region6: #{tpu_custom_call.1} parent=1 // loop_footer
      %s23 = sadd.s32 1, %s19
    $region7: #{tpu_custom_call.1} parent=1 // loop_footer_branch
      %18 = sbr.rel target = $region3
    $region8: #{tpu_custom_call.1} parent=1 // loop_exit
      _
    %1566 = vsyncpa [#allocation3], 1
    %s1567 = scalar_lea.sflag [#allocation3], 1
    %1568 = vsyncpa %s1567, 1
    %1569 = vsyncpa [#allocation4], 1
    %s1570 = scalar_lea.sflag [#allocation4], 1
    %1571 = vsyncpa %s1570, 1

</llo_original>
